<compile_context>
chip_gen: v7x
topology: tpu7x:2x2x1
jax: 0.10.0
libtpu: 0.0.40
codegen_flags: <defaults>
</compile_context>

<pallas_src>
import functools

import jax
import jax.numpy as jnp
from jax import lax
from jax.experimental import pallas as pl
from jax.experimental.pallas import tpu as pltpu

MAX_TILE_B = 1024   # cap on batch rows per grid step
OUT_LANES = 128     # lane-dense packed output width
VALUE_LANE = 127    # lane holding the critic value in the packed output


def _pick_tile_b(B):
    """Batch tile: large enough to amortize per-grid-step overhead, but keep
    >=2 grid steps when the batch allows so v7x megacore can split the work."""
    B8 = max(8, pl.cdiv(B, 8) * 8)                 # sublane-aligned batch
    if B8 <= 128:
        return B8                                   # single small step
    if B8 <= 2 * MAX_TILE_B:
        half = pl.cdiv(B8, 2)
        return max(128, pl.cdiv(half, 128) * 128)   # ~2 steps, 128-row aligned
    return MAX_TILE_B


def actor_critic_kernel(state_ref,
                        w1cat_ref, b1cat_ref,
                        cw2_ref, cb2_ref,
                        aw2_ref, ab2_ref,
                        aw3_ref, ab3_ref,
                        out_ref, *, hidden):
    x = state_ref[...]                                   # (TILE_B, num_inputs) f32
    xb = x.astype(jnp.bfloat16)

    # ---- fused first layers (critic_linear1 | actor_linear1 share input x) ----
    y = jnp.dot(xb, w1cat_ref[...], preferred_element_type=jnp.float32) + b1cat_ref[...]
    y = jnp.maximum(y, 0.0)                               # ReLU (f32)
    h_c = y[:, :hidden]                                   # relu(critic_linear1(x))  (TILE_B, hidden)
    h_a = y[:, hidden:]                                   # relu(actor_linear1(x))   (TILE_B, 128)

    # ---- critic_linear2: (hidden -> 1) as VPU multiply + lane reduce (no MXU) ----
    v = jnp.sum(h_c * cw2_ref[...], axis=1, keepdims=True) + cb2_ref[...]    # (TILE_B, 1) f32

    # ---- actor head (bf16 MXU operands, f32 accumulation) ----
    a = jnp.dot(h_a.astype(jnp.bfloat16), aw2_ref[...],
                preferred_element_type=jnp.float32) + ab2_ref[...]
    a = jnp.maximum(a, 0.0)
    # ab3 has -1e30 in padded lanes (and aw3 padded columns are 0), so the
    # softmax pad mask is already folded into the bias.
    logits = jnp.dot(a.astype(jnp.bfloat16), aw3_ref[...],
                     preferred_element_type=jnp.float32) + ab3_ref[...]      # (TILE_B, 128)

    # softmax over real action lanes; padded lanes underflow to exactly 0.
    m = jnp.max(logits, axis=1, keepdims=True)
    e = jnp.exp(logits - m)
    denom = jnp.sum(e, axis=1, keepdims=True)
    probs = e * (1.0 / denom)      # exact reciprocal -> sum(policy) == 1 to f32 precision

    # ---- pack lane-dense output: policy in lanes [0, A), value in lane 127 ----
    lane = lax.broadcasted_iota(jnp.int32, (1, OUT_LANES), 1)
    value_onehot = (lane == VALUE_LANE).astype(jnp.float32)   # (1, 128)
    out_ref[...] = probs + v * value_onehot                   # lane 127 prob is exactly 0


def prepare_params(params, hidden, num_actions):
    """One-time parameter repacking for the kernel layout (bf16 MXU weights)."""
    assert num_actions <= VALUE_LANE, "num_actions must fit below the value lane"
    w1cat = jnp.concatenate([params["cw1"], params["aw1"]], axis=1).astype(jnp.bfloat16)
    b1cat = jnp.concatenate([params["cb1"], params["ab1"]], axis=1)           # (1, hidden+128) f32
    cw2_row = params["cw2"].T                                                 # (1, hidden) f32
    aw3p = (jnp.zeros((hidden, OUT_LANES), jnp.float32)
            .at[:, :num_actions].set(params["aw3"])).astype(jnp.bfloat16)
    # Fold the softmax pad mask into the bias: padded lanes -> -1e30 so exp()==0.
    ab3p = (jnp.full((1, OUT_LANES), -1e30, jnp.float32)
            .at[:, :num_actions].set(params["ab3"]))
    return dict(w1cat=w1cat, b1cat=b1cat, cw2_row=cw2_row, cb2=params["cb2"],
                aw2=params["aw2"].astype(jnp.bfloat16), ab2=params["ab2"],
                aw3p=aw3p, ab3p=ab3p)


def actor_critic_forward(state, prepped, *, hidden, num_actions):
    """state: (B, num_inputs) f32. Returns (value (B,1), policy (B,num_actions))."""
    B, num_inputs = state.shape
    tile_b = _pick_tile_b(B)
    B_pad = pl.cdiv(B, tile_b) * tile_b
    if B_pad != B:
        state = jnp.pad(state, ((0, B_pad - B), (0, 0)))

    const2 = lambda i: (0, 0)                  # weights: same block every grid step
    in_specs = [
        pl.BlockSpec((tile_b, num_inputs), lambda i: (i, 0)),
        pl.BlockSpec(prepped["w1cat"].shape, const2),
        pl.BlockSpec(prepped["b1cat"].shape, const2),
        pl.BlockSpec(prepped["cw2_row"].shape, const2),
        pl.BlockSpec(prepped["cb2"].shape, const2),
        pl.BlockSpec(prepped["aw2"].shape, const2),
        pl.BlockSpec(prepped["ab2"].shape, const2),
        pl.BlockSpec(prepped["aw3p"].shape, const2),
        pl.BlockSpec(prepped["ab3p"].shape, const2),
    ]
    out_specs = pl.BlockSpec((tile_b, OUT_LANES), lambda i: (i, 0))

    kernel = functools.partial(actor_critic_kernel, hidden=hidden)

    packed = pl.pallas_call(
        kernel,
        out_shape=jax.ShapeDtypeStruct((B_pad, OUT_LANES), jnp.float32),
        grid=(B_pad // tile_b,),
        in_specs=in_specs,
        out_specs=out_specs,
        compiler_params=pltpu.CompilerParams(dimension_semantics=("parallel",)),
    )(state, prepped["w1cat"], prepped["b1cat"], prepped["cw2_row"], prepped["cb2"],
      prepped["aw2"], prepped["ab2"], prepped["aw3p"], prepped["ab3p"])

    value = packed[:B, VALUE_LANE:VALUE_LANE + 1]     # (B, 1)
    policy = packed[:B, :num_actions]                 # (B, num_actions)
    return value, policy


def init_params(key, num_inputs, num_actions, hidden_size):
    """torch.nn.Linear-style init: U(-1/sqrt(fan_in), 1/sqrt(fan_in)).
    Weights stored as (in, out) so the forward computes x @ W + b."""
    def linear(k, fan_in, fan_out):
        kw, kb = jax.random.split(k)
        bound = 1.0 / jnp.sqrt(fan_in)
        w = jax.random.uniform(kw, (fan_in, fan_out), jnp.float32, -bound, bound)
        b = jax.random.uniform(kb, (1, fan_out), jnp.float32, -bound, bound)
        return w, b

    ks = jax.random.split(key, 5)
    cw1, cb1 = linear(ks[0], num_inputs, hidden_size)   # critic_linear1
    cw2, cb2 = linear(ks[1], hidden_size, 1)            # critic_linear2
    aw1, ab1 = linear(ks[2], num_inputs, 128)           # actor_linear1
    aw2, ab2 = linear(ks[3], 128, hidden_size)          # actor_linear2
    aw3, ab3 = linear(ks[4], hidden_size, num_actions)  # actor_linear3
    return dict(cw1=cw1, cb1=cb1, cw2=cw2, cb2=cb2,
                aw1=aw1, ab1=ab1, aw2=aw2, ab2=ab2, aw3=aw3, ab3=ab3)


def reference_forward_f32(state, p):
    """Plain-JAX f32 reference mirroring the PyTorch forward."""
    h = jnp.maximum(state @ p["cw1"] + p["cb1"], 0.0)
    value = h @ p["cw2"] + p["cb2"]
    a = jnp.maximum(state @ p["aw1"] + p["ab1"], 0.0)
    a = jnp.maximum(a @ p["aw2"] + p["ab2"], 0.0)
    logits = a @ p["aw3"] + p["ab3"]
    return value, jax.nn.softmax(logits, axis=1)


def reference_forward_bf16(state, p):
    """Reference that mirrors the kernel's bf16 matmul operands / f32 accumulation."""
    bf = jnp.bfloat16
    xb = state.astype(bf)
    h = jnp.maximum(jnp.dot(xb, p["cw1"].astype(bf),
                            preferred_element_type=jnp.float32) + p["cb1"], 0.0)
    value = jnp.sum(h * p["cw2"].T, axis=1, keepdims=True) + p["cb2"]
    a = jnp.maximum(jnp.dot(xb, p["aw1"].astype(bf),
                            preferred_element_type=jnp.float32) + p["ab1"], 0.0)
    a = jnp.maximum(jnp.dot(a.astype(bf), p["aw2"].astype(bf),
                            preferred_element_type=jnp.float32) + p["ab2"], 0.0)
    logits = jnp.dot(a.astype(bf), p["aw3"].astype(bf),
                     preferred_element_type=jnp.float32) + p["ab3"]
    return value, jax.nn.softmax(logits, axis=1)


if __name__ == "__main__":
    num_inputs, num_actions, hidden_size = 32, 8, 256

    key = jax.random.PRNGKey(0)
    k_params, k_state = jax.random.split(key)
    params = init_params(k_params, num_inputs, num_actions, hidden_size)
    prepped = prepare_params(params, hidden_size, num_actions)

    # Batched states: B=256 -> two 128-row tiles, exercising the batch grid
    # (and both TensorCores on v7x via dimension_semantics=("parallel",)).
    B = 256
    state = jax.random.normal(k_state, (B, num_inputs), jnp.float32)

    value, policy = actor_critic_forward(state, prepped,
                                         hidden=hidden_size, num_actions=num_actions)
    value, policy = jax.block_until_ready((value, policy))
    assert value.shape == (B, 1) and policy.shape == (B, num_actions)

    # Exact normalization (softmax uses an exact reciprocal).
    assert jnp.allclose(jnp.sum(policy, axis=1), 1.0, atol=1e-4)

    # Tight check vs a reference that mirrors the kernel's bf16 matmul numerics.
    v_b16, p_b16 = reference_forward_bf16(state, params)
    assert jnp.allclose(value, v_b16, atol=5e-4, rtol=5e-4)
    assert jnp.allclose(policy, p_b16, atol=5e-4, rtol=5e-4)

    # Loose check vs the pure-f32 reference (bf16 matmul operands -> small drift).
    v_f32, p_f32 = reference_forward_f32(state, params)
    assert jnp.allclose(value, v_f32, atol=5e-2, rtol=5e-2)
    assert jnp.allclose(policy, p_f32, atol=2e-2, rtol=2e-2)

    # Torch-style single-state path (unsqueeze(0) -> B=1, padded internally).
    s1 = state[:1]
    v1, p1 = actor_critic_forward(s1, prepped, hidden=hidden_size, num_actions=num_actions)
    v1, p1 = jax.block_until_ready((v1, p1))
    assert v1.shape == (1, 1) and p1.shape == (1, num_actions)
    assert jnp.allclose(v1, v_b16[:1], atol=5e-4, rtol=5e-4)
    assert jnp.allclose(p1, p_b16[:1], atol=5e-4, rtol=5e-4)
    assert jnp.allclose(jnp.sum(p1, axis=1), 1.0, atol=1e-4)

    print("KERNEL_OK")
</pallas_src>

<mosaic_0001>
module attributes {stable_mosaic.version = 11 : i64} {
  func.func @actor_critic_kernel(%arg0: i32, %arg1: memref<128x32xf32, #tpu.memory_space<vmem>>, %arg2: memref<32x384xbf16, #tpu.memory_space<vmem>>, %arg3: memref<1x384xf32, #tpu.memory_space<vmem>>, %arg4: memref<1x256xf32, #tpu.memory_space<vmem>>, %arg5: memref<1x1xf32, #tpu.memory_space<vmem>>, %arg6: memref<128x256xbf16, #tpu.memory_space<vmem>>, %arg7: memref<1x256xf32, #tpu.memory_space<vmem>>, %arg8: memref<256x128xbf16, #tpu.memory_space<vmem>>, %arg9: memref<1x128xf32, #tpu.memory_space<vmem>>, %arg10: memref<128x128xf32, #tpu.memory_space<vmem>>) attributes {dimension_semantics = [#tpu.dimension_semantics<parallel>], iteration_bounds = array<i64: 2>, scalar_prefetch = 0 : i64, scratch_operands = 0 : i64, tpu.core_type = #tpu.core_type<tc>, window_params = [{transform_indices = @transform_0, window_bounds = array<i64: 128, 32>}, {pipeline_mode = #tpu.pipeline_mode<synchronous>, transform_indices = @transform_1, window_bounds = array<i64: 32, 384>}, {pipeline_mode = #tpu.pipeline_mode<synchronous>, transform_indices = @transform_2, window_bounds = array<i64: 1, 384>}, {pipeline_mode = #tpu.pipeline_mode<synchronous>, transform_indices = @transform_3, window_bounds = array<i64: 1, 256>}, {pipeline_mode = #tpu.pipeline_mode<synchronous>, transform_indices = @transform_4, window_bounds = array<i64: 1, 1>}, {pipeline_mode = #tpu.pipeline_mode<synchronous>, transform_indices = @transform_5, window_bounds = array<i64: 128, 256>}, {pipeline_mode = #tpu.pipeline_mode<synchronous>, transform_indices = @transform_6, window_bounds = array<i64: 1, 256>}, {pipeline_mode = #tpu.pipeline_mode<synchronous>, transform_indices = @transform_7, window_bounds = array<i64: 256, 128>}, {pipeline_mode = #tpu.pipeline_mode<synchronous>, transform_indices = @transform_8, window_bounds = array<i64: 1, 128>}, {transform_indices = @transform_9, window_bounds = array<i64: 128, 128>}]} {
    %c0 = arith.constant 0 : index
    %c0_0 = arith.constant 0 : index
    %0 = vector.load %arg1[%c0, %c0_0] : memref<128x32xf32, #tpu.memory_space<vmem>>, vector<128x32xf32>
    %1 = arith.truncf %0 : vector<128x32xf32> to vector<128x32xbf16>
    %c0_1 = arith.constant 0 : index
    %c0_2 = arith.constant 0 : index
    %2 = vector.load %arg2[%c0_1, %c0_2] : memref<32x384xbf16, #tpu.memory_space<vmem>>, vector<32x384xbf16>
    %cst = arith.constant dense<0.000000e+00> : vector<128x384xf32>
    %3 = tpu.matmul %1, %2, %cst {dimension_numbers = #tpu.dot_dimension_numbers<[1], [0], [0], [1], [0, 0, 1, 1], [], []>} : vector<128x32xbf16>, vector<32x384xbf16>, vector<128x384xf32> -> vector<128x384xf32>
    %c0_3 = arith.constant 0 : index
    %c0_4 = arith.constant 0 : index
    %4 = vector.load %arg3[%c0_3, %c0_4] : memref<1x384xf32, #tpu.memory_space<vmem>>, vector<1x384xf32>
    %5 = vector.broadcast %4 : vector<1x384xf32> to vector<128x384xf32>
    %6 = arith.addf %3, %5 : vector<128x384xf32>
    %cst_5 = arith.constant 0.000000e+00 : f32
    %7 = vector.broadcast %cst_5 : f32 to vector<128x384xf32>
    %8 = arith.maximumf %6, %7 : vector<128x384xf32>
    %9 = vector.extract_strided_slice %8 {offsets = [0, 0], sizes = [128, 256], strides = [1, 1]} : vector<128x384xf32> to vector<128x256xf32>
    %10 = vector.extract_strided_slice %8 {offsets = [0, 256], sizes = [128, 128], strides = [1, 1]} : vector<128x384xf32> to vector<128x128xf32>
    %c0_6 = arith.constant 0 : index
    %c0_7 = arith.constant 0 : index
    %11 = vector.load %arg4[%c0_6, %c0_7] : memref<1x256xf32, #tpu.memory_space<vmem>>, vector<1x256xf32>
    %12 = vector.broadcast %11 : vector<1x256xf32> to vector<128x256xf32>
    %13 = arith.mulf %9, %12 : vector<128x256xf32>
    %cst_8 = arith.constant dense<0.000000e+00> : vector<128xf32>
    %14 = vector.multi_reduction <add>, %13, %cst_8 [1] : vector<128x256xf32> to vector<128xf32>
    %15 = vector.shape_cast %14 : vector<128xf32> to vector<128x1xf32>
    %c0_9 = arith.constant 0 : index
    %c0_10 = arith.constant 0 : index
    %16 = vector.load %arg5[%c0_9, %c0_10] : memref<1x1xf32, #tpu.memory_space<vmem>>, vector<1x1xf32>
    %17 = vector.broadcast %16 : vector<1x1xf32> to vector<128x1xf32>
    %18 = arith.addf %15, %17 : vector<128x1xf32>
    %19 = arith.truncf %10 : vector<128x128xf32> to vector<128x128xbf16>
    %c0_11 = arith.constant 0 : index
    %c0_12 = arith.constant 0 : index
    %20 = vector.load %arg6[%c0_11, %c0_12] : memref<128x256xbf16, #tpu.memory_space<vmem>>, vector<128x256xbf16>
    %cst_13 = arith.constant dense<0.000000e+00> : vector<128x256xf32>
    %21 = tpu.matmul %19, %20, %cst_13 {dimension_numbers = #tpu.dot_dimension_numbers<[1], [0], [0], [1], [0, 0, 1, 1], [], []>} : vector<128x128xbf16>, vector<128x256xbf16>, vector<128x256xf32> -> vector<128x256xf32>
    %c0_14 = arith.constant 0 : index
    %c0_15 = arith.constant 0 : index
    %22 = vector.load %arg7[%c0_14, %c0_15] : memref<1x256xf32, #tpu.memory_space<vmem>>, vector<1x256xf32>
    %23 = vector.broadcast %22 : vector<1x256xf32> to vector<128x256xf32>
    %24 = arith.addf %21, %23 : vector<128x256xf32>
    %cst_16 = arith.constant 0.000000e+00 : f32
    %25 = vector.broadcast %cst_16 : f32 to vector<128x256xf32>
    %26 = arith.maximumf %24, %25 : vector<128x256xf32>
    %27 = arith.truncf %26 : vector<128x256xf32> to vector<128x256xbf16>
    %c0_17 = arith.constant 0 : index
    %c0_18 = arith.constant 0 : index
    %28 = vector.load %arg8[%c0_17, %c0_18] : memref<256x128xbf16, #tpu.memory_space<vmem>>, vector<256x128xbf16>
    %cst_19 = arith.constant dense<0.000000e+00> : vector<128x128xf32>
    %29 = tpu.matmul %27, %28, %cst_19 {dimension_numbers = #tpu.dot_dimension_numbers<[1], [0], [0], [1], [0, 0, 1, 1], [], []>} : vector<128x256xbf16>, vector<256x128xbf16>, vector<128x128xf32> -> vector<128x128xf32>
    %c0_20 = arith.constant 0 : index
    %c0_21 = arith.constant 0 : index
    %30 = vector.load %arg9[%c0_20, %c0_21] : memref<1x128xf32, #tpu.memory_space<vmem>>, vector<1x128xf32>
    %31 = vector.broadcast %30 : vector<1x128xf32> to vector<128x128xf32>
    %32 = arith.addf %29, %31 : vector<128x128xf32>
    %cst_22 = arith.constant dense<0xFF800000> : vector<128xf32>
    %33 = vector.multi_reduction <maximumf>, %32, %cst_22 [1] : vector<128x128xf32> to vector<128xf32>
    %34 = vector.shape_cast %33 : vector<128xf32> to vector<128x1xf32>
    %35 = vector.broadcast %34 : vector<128x1xf32> to vector<128x128xf32>
    %36 = arith.subf %32, %35 : vector<128x128xf32>
    %37 = math.exp %36 : vector<128x128xf32>
    %cst_23 = arith.constant dense<0.000000e+00> : vector<128xf32>
    %38 = vector.multi_reduction <add>, %37, %cst_23 [1] : vector<128x128xf32> to vector<128xf32>
    %39 = vector.shape_cast %38 : vector<128xf32> to vector<128x1xf32>
    %cst_24 = arith.constant 1.000000e+00 : f32
    %40 = vector.broadcast %cst_24 : f32 to vector<128x1xf32>
    %41 = arith.divf %40, %39 : vector<128x1xf32>
    %42 = vector.broadcast %41 : vector<128x1xf32> to vector<128x128xf32>
    %43 = arith.mulf %37, %42 : vector<128x128xf32>
    %44 = tpu.iota {dimensions = array<i32: 1>} : vector<1x128xi32>
    %c127_i32 = arith.constant 127 : i32
    %45 = vector.broadcast %c127_i32 : i32 to vector<1x128xi32>
    %46 = arith.cmpi eq, %44, %45 : vector<1x128xi32>
    %47 = arith.extui %46 : vector<1x128xi1> to vector<1x128xi32>
    %48 = arith.sitofp %47 : vector<1x128xi32> to vector<1x128xf32>
    %49 = vector.broadcast %18 : vector<128x1xf32> to vector<128x128xf32>
    %50 = vector.broadcast %48 : vector<1x128xf32> to vector<128x128xf32>
    %51 = arith.mulf %49, %50 : vector<128x128xf32>
    %52 = arith.addf %43, %51 : vector<128x128xf32>
    %c0_25 = arith.constant 0 : index
    %c0_26 = arith.constant 0 : index
    %53 = vector.load %arg10[%c0_25, %c0_26] : memref<128x128xf32, #tpu.memory_space<vmem>>, vector<128x128xf32>
    tpu.vector_store %arg10[%c0_25, %c0_26], %52 {strides = array<i32>} : memref<128x128xf32, #tpu.memory_space<vmem>>, vector<128x128xf32>,
    return
  }
  func.func @transform_0(%arg0: i32) -> (i32, i32) {
    %c0_i32 = arith.constant 0 : i32
    %c0_i32_0 = arith.constant 0 : i32
    return %arg0, %c0_i32 : i32, i32
  }
  func.func @transform_1(%arg0: i32) -> (i32, i32) {
    %c0_i32 = arith.constant 0 : i32
    %c0_i32_0 = arith.constant 0 : i32
    %c0_i32_1 = arith.constant 0 : i32
    return %c0_i32, %c0_i32_0 : i32, i32
  }
  func.func @transform_2(%arg0: i32) -> (i32, i32) {
    %c0_i32 = arith.constant 0 : i32
    %c0_i32_0 = arith.constant 0 : i32
    %c0_i32_1 = arith.constant 0 : i32
    return %c0_i32, %c0_i32_0 : i32, i32
  }
  func.func @transform_3(%arg0: i32) -> (i32, i32) {
    %c0_i32 = arith.constant 0 : i32
    %c0_i32_0 = arith.constant 0 : i32
    %c0_i32_1 = arith.constant 0 : i32
    return %c0_i32, %c0_i32_0 : i32, i32
  }
  func.func @transform_4(%arg0: i32) -> (i32, i32) {
    %c0_i32 = arith.constant 0 : i32
    %c0_i32_0 = arith.constant 0 : i32
    %c0_i32_1 = arith.constant 0 : i32
    return %c0_i32, %c0_i32_0 : i32, i32
  }
  func.func @transform_5(%arg0: i32) -> (i32, i32) {
    %c0_i32 = arith.constant 0 : i32
    %c0_i32_0 = arith.constant 0 : i32
    %c0_i32_1 = arith.constant 0 : i32
    return %c0_i32, %c0_i32_0 : i32, i32
  }
  func.func @transform_6(%arg0: i32) -> (i32, i32) {
    %c0_i32 = arith.constant 0 : i32
    %c0_i32_0 = arith.constant 0 : i32
    %c0_i32_1 = arith.constant 0 : i32
    return %c0_i32, %c0_i32_0 : i32, i32
  }
  func.func @transform_7(%arg0: i32) -> (i32, i32) {
    %c0_i32 = arith.constant 0 : i32
    %c0_i32_0 = arith.constant 0 : i32
    %c0_i32_1 = arith.constant 0 : i32
    return %c0_i32, %c0_i32_0 : i32, i32
  }
  func.func @transform_8(%arg0: i32) -> (i32, i32) {
    %c0_i32 = arith.constant 0 : i32
    %c0_i32_0 = arith.constant 0 : i32
    %c0_i32_1 = arith.constant 0 : i32
    return %c0_i32, %c0_i32_0 : i32, i32
  }
  func.func @transform_9(%arg0: i32) -> (i32, i32) {
    %c0_i32 = arith.constant 0 : i32
    %c0_i32_0 = arith.constant 0 : i32
    return %arg0, %c0_i32 : i32, i32
  }
}

</mosaic_0001>

<llo_original>
// kernel: tpu_custom_call.1
$region0: #{tpu_custom_call.1}
  #allocation0 [shape = 'u32[]', space=smem, size = 0x4, offset = 0x4, fixed_abs, tag = 'smem constant byte address 0x4 - core index']
  #allocation1 [shape = 'u32[144,128]{1,0:T(1,128)}', space=vmem, size = 0x12000, scoped, tag = 'internal scratch']
  #allocation2 [shape = 'f32[1,1]{1,0:T(1,128)S(1)}', space=vmem, size = 0x200, scoped, tag = 'scoped memory for tpu_custom_call.1']
  %s0 = inlined_call_operand.vmem [shape: f32[256,32], index: 0, kind: input, shape index: {}]
  %s1 = inlined_call_operand.vmem [shape: bf16[32,384], index: 1, kind: input, shape index: {}]
  %s2 = inlined_call_operand.vmem [shape: f32[1,384], index: 2, kind: input, shape index: {}]
  %s3 = inlined_call_operand.vmem [shape: f32[1,256], index: 3, kind: input, shape index: {}]
  %s4 = inlined_call_operand.<no memory space> [shape: f32[1,1], index: 4, kind: input, shape index: {}]
  %s5 = inlined_call_operand.vmem [shape: bf16[128,256], index: 5, kind: input, shape index: {}]
  %s6 = inlined_call_operand.vmem [shape: f32[1,256], index: 6, kind: input, shape index: {}]
  %s7 = inlined_call_operand.vmem [shape: bf16[256,128], index: 7, kind: input, shape index: {}]
  %s8 = inlined_call_operand.vmem [shape: f32[1,128], index: 8, kind: input, shape index: {}]
  %s9 = inlined_call_operand.hbm [shape: f32[256,128], index: 9, kind: output, shape index: {}]
  %s10 = sld [smem:[#allocation0]]
  $region69: #{tpu_custom_call.1} parent=0
    _
  %s12 = ssub.s32 1, %s10
  %s13 = scalar_select 0, %s12, %s10
  %v14 = vstv %s4
  %15 = vst [vmem:[#allocation2] sm:$0x1] %v14
  $region1: #{tpu_custom_call.1} parent=0
    #allocation3 [shape = 'u8[131072]{0}', space=vmem, size = 0x20000, scoped, tag = 'output window, operand 0']
    #allocation4 [shape = 's32[2]{0}', space=sflag, size = 0x8, scoped, tag = 'scoped memory for tpu_custom_call.1']
    %16 = vsyncpa [#allocation4], 0
    %s17 = scalar_lea.sflag [#allocation4], 1
    %18 = vsyncpa %s17, 0
    loop: start=0, step=1, limit=4
    $region2: #{tpu_custom_call.1} parent=1 // loop_pre_header
      _
    $region3: #{tpu_custom_call.1} parent=1 // loop_header
      %s20 = sphi 0, %s24
      %p21 = scmp.ge.s32.totalorder %s20, 4
      %s30 = sphi 0, %s32
      %s33 = sphi 0, %s30
      %s34 = sphi 0, %s33
      %s50 = sphi 0, %s34
      %s54 = sphi 0, %s54
      %s56 = sphi 0, %s54
      %s57 = sphi 0, %s56
      %s71 = sphi 0, %s57
      %s75 = sphi 0, %s75
      %s77 = sphi 0, %s75
      %s78 = sphi 0, %s77
      %s92 = sphi 0, %s78
      %s96 = sphi 0, %s96
      %s98 = sphi 0, %s96
      %s99 = sphi 0, %s98
      %s113 = sphi 0, %s99
      %s117 = sphi 0, %s117
      %s119 = sphi 0, %s117
      %s120 = sphi 0, %s119
      %s134 = sphi 0, %s120
      %s138 = sphi 0, %s138
      %s140 = sphi 0, %s138
      %s141 = sphi 0, %s140
      %s155 = sphi 0, %s141
      %s159 = sphi 0, %s159
      %s161 = sphi 0, %s159
      %s162 = sphi 0, %s161
      %s176 = sphi 0, %s162
      %s180 = sphi 0, %s180
      %s182 = sphi 0, %s180
      %s183 = sphi 0, %s182
      %s197 = sphi 0, %s183
      %s201 = sphi 0, %s201
      %s203 = sphi 0, %s201
      %s204 = sphi 0, %s203
      %s218 = sphi 0, %s204
      %s224 = sphi 0, %s226
      %s227 = sphi 0, %s224
      %s228 = sphi 0, %s227
      %s244 = sphi 0, %s228
    $region4: #{tpu_custom_call.1} parent=1 // loop_header_branch
      %23 = sbr.rel (%p21) target = $region8
    $region5: #{tpu_custom_call.1} parent=1 // loop_body
      %s25 = ssub.s32 %s20, 1
      %s26 = ssub.s32 %s20, 2
      %s27 = sadd.s32 %s20, 1
      %s28 = ssub.s32 %s20, %s27
      %p29 = scmp.eq.s32.totalorder %s28, 0
      %s31 = sadd.s32 %s30, 1
      %s32 = scalar_select %p29, %s30, %s31
      %p35 = pneg %p29
      %p36 = scmp.eq.s32.totalorder %s20, 1
      %p37 = por %p35, %p36
      %p38 = scmp.ne.s32.totalorder %s30, %s33
      %p39 = scmp.eq.s32.totalorder %s20, 0
      %p40 = por %p38, %p39
      %p41 = scmp.ne.s32.totalorder %s30, %s33
      %p42 = scmp.eq.s32.totalorder %s25, 1
      %p43 = por %p41, %p42
      %p44 = scmp.ne.s32.totalorder %s33, %s34
      %p45 = scmp.eq.s32.totalorder %s25, 0
      %p46 = por %p44, %p45
      %p47 = scmp.ne.s32.totalorder %s33, %s34
      %p48 = scmp.eq.s32.totalorder %s26, 1
      %p49 = por %p47, %p48
      %p51 = scmp.ne.s32.totalorder %s34, %s50
      %p52 = scmp.eq.s32.totalorder %s26, 0
      %p53 = por %p51, %p52
      %s55 = sadd.s32 %s54, 1
      %p58 = scmp.eq.s32.totalorder %s20, 1
      %p59 = scmp.ne.s32.totalorder %s54, %s56
      %p60 = scmp.eq.s32.totalorder %s20, 0
      %p61 = por %p59, %p60
      %p62 = scmp.ne.s32.totalorder %s54, %s56
      %p63 = scmp.eq.s32.totalorder %s25, 1
      %p64 = por %p62, %p63
      %p65 = scmp.ne.s32.totalorder %s56, %s57
      %p66 = scmp.eq.s32.totalorder %s25, 0
      %p67 = por %p65, %p66
      %p68 = scmp.ne.s32.totalorder %s56, %s57
      %p69 = scmp.eq.s32.totalorder %s26, 1
      %p70 = por %p68, %p69
      %p72 = scmp.ne.s32.totalorder %s57, %s71
      %p73 = scmp.eq.s32.totalorder %s26, 0
      %p74 = por %p72, %p73
      %s76 = sadd.s32 %s75, 1
      %p79 = scmp.eq.s32.totalorder %s20, 1
      %p80 = scmp.ne.s32.totalorder %s75, %s77
      %p81 = scmp.eq.s32.totalorder %s20, 0
      %p82 = por %p80, %p81
      %p83 = scmp.ne.s32.totalorder %s75, %s77
      %p84 = scmp.eq.s32.totalorder %s25, 1
      %p85 = por %p83, %p84
      %p86 = scmp.ne.s32.totalorder %s77, %s78
      %p87 = scmp.eq.s32.totalorder %s25, 0
      %p88 = por %p86, %p87
      %p89 = scmp.ne.s32.totalorder %s77, %s78
      %p90 = scmp.eq.s32.totalorder %s26, 1
      %p91 = por %p89, %p90
      %p93 = scmp.ne.s32.totalorder %s78, %s92
      %p94 = scmp.eq.s32.totalorder %s26, 0
      %p95 = por %p93, %p94
      %s97 = sadd.s32 %s96, 1
      %p100 = scmp.eq.s32.totalorder %s20, 1
      %p101 = scmp.ne.s32.totalorder %s96, %s98
      %p102 = scmp.eq.s32.totalorder %s20, 0
      %p103 = por %p101, %p102
      %p104 = scmp.ne.s32.totalorder %s96, %s98
      %p105 = scmp.eq.s32.totalorder %s25, 1
      %p106 = por %p104, %p105
      %p107 = scmp.ne.s32.totalorder %s98, %s99
      %p108 = scmp.eq.s32.totalorder %s25, 0
      %p109 = por %p107, %p108
      %p110 = scmp.ne.s32.totalorder %s98, %s99
      %p111 = scmp.eq.s32.totalorder %s26, 1
      %p112 = por %p110, %p111
      %p114 = scmp.ne.s32.totalorder %s99, %s113
      %p115 = scmp.eq.s32.totalorder %s26, 0
      %p116 = por %p114, %p115
      %s118 = sadd.s32 %s117, 1
      %p121 = scmp.eq.s32.totalorder %s20, 1
      %p122 = scmp.ne.s32.totalorder %s117, %s119
      %p123 = scmp.eq.s32.totalorder %s20, 0
      %p124 = por %p122, %p123
      %p125 = scmp.ne.s32.totalorder %s117, %s119
      %p126 = scmp.eq.s32.totalorder %s25, 1
      %p127 = por %p125, %p126
      %p128 = scmp.ne.s32.totalorder %s119, %s120
      %p129 = scmp.eq.s32.totalorder %s25, 0
      %p130 = por %p128, %p129
      %p131 = scmp.ne.s32.totalorder %s119, %s120
      %p132 = scmp.eq.s32.totalorder %s26, 1
      %p133 = por %p131, %p132
      %p135 = scmp.ne.s32.totalorder %s120, %s134
      %p136 = scmp.eq.s32.totalorder %s26, 0
      %p137 = por %p135, %p136
      %s139 = sadd.s32 %s138, 1
      %p142 = scmp.eq.s32.totalorder %s20, 1
      %p143 = scmp.ne.s32.totalorder %s138, %s140
      %p144 = scmp.eq.s32.totalorder %s20, 0
      %p145 = por %p143, %p144
      %p146 = scmp.ne.s32.totalorder %s138, %s140
      %p147 = scmp.eq.s32.totalorder %s25, 1
      %p148 = por %p146, %p147
      %p149 = scmp.ne.s32.totalorder %s140, %s141
      %p150 = scmp.eq.s32.totalorder %s25, 0
      %p151 = por %p149, %p150
      %p152 = scmp.ne.s32.totalorder %s140, %s141
      %p153 = scmp.eq.s32.totalorder %s26, 1
      %p154 = por %p152, %p153
      %p156 = scmp.ne.s32.totalorder %s141, %s155
      %p157 = scmp.eq.s32.totalorder %s26, 0
      %p158 = por %p156, %p157
      %s160 = sadd.s32 %s159, 1
      %p163 = scmp.eq.s32.totalorder %s20, 1
      %p164 = scmp.ne.s32.totalorder %s159, %s161
      %p165 = scmp.eq.s32.totalorder %s20, 0
      %p166 = por %p164, %p165
      %p167 = scmp.ne.s32.totalorder %s159, %s161
      %p168 = scmp.eq.s32.totalorder %s25, 1
      %p169 = por %p167, %p168
      %p170 = scmp.ne.s32.totalorder %s161, %s162
      %p171 = scmp.eq.s32.totalorder %s25, 0
      %p172 = por %p170, %p171
      %p173 = scmp.ne.s32.totalorder %s161, %s162
      %p174 = scmp.eq.s32.totalorder %s26, 1
      %p175 = por %p173, %p174
      %p177 = scmp.ne.s32.totalorder %s162, %s176
      %p178 = scmp.eq.s32.totalorder %s26, 0
      %p179 = por %p177, %p178
      %s181 = sadd.s32 %s180, 1
      %p184 = scmp.eq.s32.totalorder %s20, 1
      %p185 = scmp.ne.s32.totalorder %s180, %s182
      %p186 = scmp.eq.s32.totalorder %s20, 0
      %p187 = por %p185, %p186
      %p188 = scmp.ne.s32.totalorder %s180, %s182
      %p189 = scmp.eq.s32.totalorder %s25, 1
      %p190 = por %p188, %p189
      %p191 = scmp.ne.s32.totalorder %s182, %s183
      %p192 = scmp.eq.s32.totalorder %s25, 0
      %p193 = por %p191, %p192
      %p194 = scmp.ne.s32.totalorder %s182, %s183
      %p195 = scmp.eq.s32.totalorder %s26, 1
      %p196 = por %p194, %p195
      %p198 = scmp.ne.s32.totalorder %s183, %s197
      %p199 = scmp.eq.s32.totalorder %s26, 0
      %p200 = por %p198, %p199
      %s202 = sadd.s32 %s201, 1
      %p205 = scmp.eq.s32.totalorder %s20, 1
      %p206 = scmp.ne.s32.totalorder %s201, %s203
      %p207 = scmp.eq.s32.totalorder %s20, 0
      %p208 = por %p206, %p207
      %p209 = scmp.ne.s32.totalorder %s201, %s203
      %p210 = scmp.eq.s32.totalorder %s25, 1
      %p211 = por %p209, %p210
      %p212 = scmp.ne.s32.totalorder %s203, %s204
      %p213 = scmp.eq.s32.totalorder %s25, 0
      %p214 = por %p212, %p213
      %p215 = scmp.ne.s32.totalorder %s203, %s204
      %p216 = scmp.eq.s32.totalorder %s26, 1
      %p217 = por %p215, %p216
      %p219 = scmp.ne.s32.totalorder %s204, %s218
      %p220 = scmp.eq.s32.totalorder %s26, 0
      %p221 = por %p219, %p220
      %s222 = ssub.s32 %s20, %s27
      %p223 = scmp.eq.s32.totalorder %s222, 0
      %s225 = sadd.s32 %s224, 1
      %s226 = scalar_select %p223, %s224, %s225
      %p229 = pneg %p223
      %p230 = scmp.eq.s32.totalorder %s20, 1
      %p231 = por %p229, %p230
      %p232 = scmp.ne.s32.totalorder %s224, %s227
      %p233 = scmp.eq.s32.totalorder %s20, 0
      %p234 = por %p232, %p233
      %p235 = scmp.ne.s32.totalorder %s224, %s227
      %p236 = scmp.eq.s32.totalorder %s25, 1
      %p237 = por %p235, %p236
      %p238 = scmp.ne.s32.totalorder %s227, %s228
      %p239 = scmp.eq.s32.totalorder %s25, 0
      %p240 = por %p238, %p239
      %p241 = scmp.ne.s32.totalorder %s227, %s228
      %p242 = scmp.eq.s32.totalorder %s26, 1
      %p243 = por %p241, %p242
      %p245 = scmp.ne.s32.totalorder %s228, %s244
      %p246 = scmp.eq.s32.totalorder %s26, 0
      %p247 = por %p245, %p246
      %p248 = scmp.le.s32.totalorder 1, %s20
      %p249 = scmp.lt.s32.totalorder %s20, 3
      %p250 = pnand %p248, %p249
      %p251 = pneg %p250
      // Predicated region
      $region9: #{tpu_custom_call.1} parent=5 // pred_check
        _
      $region10: #{tpu_custom_call.1} parent=5 // pred_check_branch
        %253 = sbr.rel (%p250) target = $region12
      $region11: #{tpu_custom_call.1} parent=5 // pred_region
        %s254 = ssub.s32 %s20, 1
        // Predicated region
        $region13: #{tpu_custom_call.1} parent=11 // pred_check
          %p255 = pneg %p67
        $region14: #{tpu_custom_call.1} parent=11 // pred_check_branch
          %257 = sbr.rel (%p255) target = $region16
        $region15: #{tpu_custom_call.1} parent=11 // pred_region
          _
        $region16: #{tpu_custom_call.1} parent=11 // pred_fallthru
          _
        // Predicated region
        $region17: #{tpu_custom_call.1} parent=11 // pred_check
          %p258 = pneg %p88
        $region18: #{tpu_custom_call.1} parent=11 // pred_check_branch
          %260 = sbr.rel (%p258) target = $region20
        $region19: #{tpu_custom_call.1} parent=11 // pred_region
          _
        $region20: #{tpu_custom_call.1} parent=11 // pred_fallthru
          _
        // Predicated region
        $region21: #{tpu_custom_call.1} parent=11 // pred_check
          %p261 = pneg %p109
        $region22: #{tpu_custom_call.1} parent=11 // pred_check_branch
          %263 = sbr.rel (%p261) target = $region24
        $region23: #{tpu_custom_call.1} parent=11 // pred_region
          _
        $region24: #{tpu_custom_call.1} parent=11 // pred_fallthru
          _
        // Predicated region
        $region25: #{tpu_custom_call.1} parent=11 // pred_check
          %p264 = pneg %p130
        $region26: #{tpu_custom_call.1} parent=11 // pred_check_branch
          %266 = sbr.rel (%p264) target = $region28
        $region27: #{tpu_custom_call.1} parent=11 // pred_region
          _
        $region28: #{tpu_custom_call.1} parent=11 // pred_fallthru
          _
        // Predicated region
        $region29: #{tpu_custom_call.1} parent=11 // pred_check
          %p267 = pneg %p151
        $region30: #{tpu_custom_call.1} parent=11 // pred_check_branch
          %269 = sbr.rel (%p267) target = $region32
        $region31: #{tpu_custom_call.1} parent=11 // pred_region
          _
        $region32: #{tpu_custom_call.1} parent=11 // pred_fallthru
          _
        // Predicated region
        $region33: #{tpu_custom_call.1} parent=11 // pred_check
          %p270 = pneg %p172
        $region34: #{tpu_custom_call.1} parent=11 // pred_check_branch
          %272 = sbr.rel (%p270) target = $region36
        $region35: #{tpu_custom_call.1} parent=11 // pred_region
          _
        $region36: #{tpu_custom_call.1} parent=11 // pred_fallthru
          _
        // Predicated region
        $region37: #{tpu_custom_call.1} parent=11 // pred_check
          %p273 = pneg %p193
        $region38: #{tpu_custom_call.1} parent=11 // pred_check_branch
          %275 = sbr.rel (%p273) target = $region40
        $region39: #{tpu_custom_call.1} parent=11 // pred_region
          _
        $region40: #{tpu_custom_call.1} parent=11 // pred_fallthru
          _
        // Predicated region
        $region41: #{tpu_custom_call.1} parent=11 // pred_check
          %p276 = pneg %p214
        $region42: #{tpu_custom_call.1} parent=11 // pred_check_branch
          %278 = sbr.rel (%p276) target = $region44
        $region43: #{tpu_custom_call.1} parent=11 // pred_region
          _
        $region44: #{tpu_custom_call.1} parent=11 // pred_fallthru
          _
      $region12: #{tpu_custom_call.1} parent=5 // pred_fallthru
        _
      %p279 = scmp.lt.s32.totalorder %s20, 2
      // Predicated region
      $region45: #{tpu_custom_call.1} parent=5 // pred_check
        %p280 = pneg %p279
      $region46: #{tpu_custom_call.1} parent=5 // pred_check_branch
        %282 = sbr.rel (%p280) target = $region48
      $region47: #{tpu_custom_call.1} parent=5 // pred_region
        // Predicated region
        $region49: #{tpu_custom_call.1} parent=47 // pred_check
          %p283 = pneg %p40
        $region50: #{tpu_custom_call.1} parent=47 // pred_check_branch
          %285 = sbr.rel (%p283) target = $region52
        $region51: #{tpu_custom_call.1} parent=47 // pred_region
          %s286 = smul.u32 16, %s20
          %p287 = scmp.lt.s32.totalorder %s286, 31
          %s288 = scalar_select %p287, %s286, 31
          %s289 = smul.addr %s288, 8
          %s290 = scalar_lea.vmem %s0, %s289
          %s291 = smul.u32 16, %s20
        $region52: #{tpu_custom_call.1} parent=47 // pred_fallthru
          _
      $region48: #{tpu_custom_call.1} parent=5 // pred_fallthru
        _
      %p292 = scmp.le.s32.totalorder 1, %s20
      %p293 = scmp.lt.s32.totalorder %s20, 3
      %p294 = pnand %p292, %p293
      %p295 = pneg %p294
      // Predicated region
      $region53: #{tpu_custom_call.1} parent=5 // pred_check
        _
      $region54: #{tpu_custom_call.1} parent=5 // pred_check_branch
        %297 = sbr.rel (%p294) target = $region56
      $region55: #{tpu_custom_call.1} parent=5 // pred_region
        %s298 = ssub.s32 %s20, 1
        %s299 = smul.u32 16, %s25
        %p300 = scmp.lt.s32.totalorder %s299, 31
        %s301 = scalar_select %p300, %s299, 31
        %s302 = smul.addr %s301, 8
        %s303 = scalar_lea.vmem %s0, %s302
        %p304 = pneg %p46
        %p305 = pneg %p43
        %p306 = pneg %p67
        %p307 = pneg %p64
        %p308 = pneg %p88
        %p309 = pneg %p85
        %p310 = pneg %p109
        %p311 = pneg %p106
        %p312 = pneg %p130
        %p313 = pneg %p127
        %p314 = pneg %p151
        %p315 = pneg %p148
        %p316 = pneg %p172
        %p317 = pneg %p169
        %p318 = pneg %p193
        %p319 = pneg %p190
        %p320 = pneg %p214
        %p321 = pneg %p211
        %p322 = pneg %p240
        %p323 = pneg %p237
        %s324 = sand.u32 %s227, 1
        %s325 = scalar_lea.sflag [#allocation4], %s324
        %s326 = sand.u32 %s227, 1
        %s327 = smul.addr %s326, 128
        %s328 = scalar_lea.vmem [#allocation3], %s327
        %s329 = smul.u32 16, %s25
        %p330 = scmp.lt.s32.totalorder %s329, 31
        %s331 = scalar_select %p330, %s329, 31
        %s332 = smul.addr %s331, 8
        %s333 = scalar_lea.vmem %s0, %s332
        %s334 = smul.u32 16, %s25
        %s335 = smul.u32 16, %s25
        %v337 = vld [vmem:[%s333] sm:$0xff]
        %v338 = vld [vmem:[%s333 + $0x8] sm:$0xff]
        %v339 = vld [vmem:[%s333 + $0x10] sm:$0xff]
        %v340 = vld [vmem:[%s333 + $0x18] sm:$0xff]
        %v341 = vld [vmem:[%s333 + $0x20] sm:$0xff]
        %v342 = vld [vmem:[%s333 + $0x28] sm:$0xff]
        %v343 = vld [vmem:[%s333 + $0x30] sm:$0xff]
        %v344 = vld [vmem:[%s333 + $0x38] sm:$0xff]
        %v345 = vld [vmem:[%s333 + $0x40] sm:$0xff]
        %v346 = vld [vmem:[%s333 + $0x48] sm:$0xff]
        %v347 = vld [vmem:[%s333 + $0x50] sm:$0xff]
        %v348 = vld [vmem:[%s333 + $0x58] sm:$0xff]
        %v349 = vld [vmem:[%s333 + $0x60] sm:$0xff]
        %v350 = vld [vmem:[%s333 + $0x68] sm:$0xff]
        %v351 = vld [vmem:[%s333 + $0x70] sm:$0xff]
        %v352 = vld [vmem:[%s333 + $0x78] sm:$0xff]
        %v353 = vpack.c.bf16 %v338, %v337
        %v354 = vpack.c.bf16 %v340, %v339
        %v355 = vpack.c.bf16 %v342, %v341
        %v356 = vpack.c.bf16 %v344, %v343
        %v357 = vpack.c.bf16 %v346, %v345
        %v358 = vpack.c.bf16 %v348, %v347
        %v359 = vpack.c.bf16 %v350, %v349
        %v360 = vpack.c.bf16 %v352, %v351
        %v361 = vld [vmem:[%s1] sm:$0xff]
        %v362 = vld [vmem:[%s1 + $0x8] sm:$0xf]
        %v363 = vld [vmem:[%s1 + $0xc] sm:$0xff]
        %v364 = vld [vmem:[%s1 + $0x14] sm:$0xf]
        %v365 = vld [vmem:[%s1 + $0x18] sm:$0xff]
        %v366 = vld [vmem:[%s1 + $0x20] sm:$0xf]
        %v367 = vld [vmem:[%s1 + $0x24] sm:$0xff]
        %v368 = vld [vmem:[%s1 + $0x2c] sm:$0xf]
        %v369 = vld [vmem:[%s2] sm:$0x7]
        %v371 = vlaneseq
        %v372 = vshrl.u32 %v371, 7
        %v373 = vsub.s32 0, %v372
        %v374 = vrot.slane %v369, %v373
        %v375 = vlaneseq
        %v376 = vshrl.u32 %v375, 7
        %v377 = vsub.s32 1, %v376
        %v378 = vrot.slane %v369, %v377
        %v379 = vlaneseq
        %v380 = vshrl.u32 %v379, 7
        %v381 = vsub.s32 2, %v380
        %v382 = vrot.slane %v369, %v381
        %v394 = vunpack.c.l.b16 %v361
        %v395 = vunpack.c.h.b16 %v361
        %v396 = vunpack.c.l.b16 %v362
        %v397 = vunpack.c.l.b16 %v363
        %v398 = vunpack.c.h.b16 %v363
        %v399 = vunpack.c.l.b16 %v364
        %v400 = vunpack.c.l.b16 %v365
        %v401 = vunpack.c.h.b16 %v365
        %v402 = vunpack.c.l.b16 %v366
        %v403 = vunpack.c.l.b16 %v367
        %v404 = vunpack.c.h.b16 %v367
        %v405 = vunpack.c.l.b16 %v368
        %v406 = vpack.c.b16 %v397, %v394
        %v407 = vpack.c.b16 %v398, %v395
        %v408 = vpack.c.b16 %v399, %v396
        %v409 = vpack.c.b16 %v403, %v400
        %v410 = vpack.c.b16 %v404, %v401
        %v411 = vpack.c.b16 %v405, %v402
        %vm418 = vcmask 261120
        %v420 = vsel %vm418, %v353, 0
        %v423 = vsel %vm418, %v354, 0
        %v426 = vsel %vm418, %v355, 0
        %v429 = vsel %vm418, %v356, 0
        %v432 = vsel %vm418, %v357, 0
        %v435 = vsel %vm418, %v358, 0
        %v438 = vsel %vm418, %v359, 0
        %v441 = vsel %vm418, %v360, 0
        %443 = vmatprep.subr.bf16.mxu0 %v407
        %444 = vmatpush1.bf16.msra.mxu0 %v406
        %445 = vmatprep.subr.bf16.mxu0 %v410
        %446 = vmatpush1.bf16.msra.mxu0 %v409
        %447 = vmatprep.subr.bf16.mxu0 0
        %448 = vmatpush1.bf16.msra.mxu0 0
        %449 = vmatprep.subr.bf16.mxu0 0
        %450 = vmatpush1.bf16.msra.mxu0 0
        %451 = vmatprep.subr.bf16.mxu0 0
        %452 = vmatpush1.bf16.msra.mxu0 0
        %453 = vmatprep.subr.bf16.mxu0 0
        %454 = vmatpush1.bf16.msra.mxu0 0
        %455 = vmatprep.subr.bf16.mxu0 0
        %456 = vmatpush1.bf16.msra.mxu0 0
        %457 = vmatprep.subr.bf16.mxu0 0
        %458 = vmatpush1.bf16.msra.mxu0 0
        %459 = vmatprep.subr.bf16.mxu0 0
        %460 = vmatpush1.bf16.msra.mxu0 0
        %461 = vmatprep.subr.bf16.mxu0 0
        %462 = vmatpush1.bf16.msra.mxu0 0
        %463 = vmatprep.subr.bf16.mxu0 0
        %464 = vmatpush1.bf16.msra.mxu0 0
        %465 = vmatprep.subr.bf16.mxu0 0
        %466 = vmatpush1.bf16.msra.mxu0 0
        %467 = vmatprep.subr.bf16.mxu0 0
        %468 = vmatpush1.bf16.msra.mxu0 0
        %469 = vmatprep.subr.bf16.mxu0 0
        %470 = vmatpush1.bf16.msra.mxu0 0
        %471 = vmatprep.subr.bf16.mxu0 0
        %472 = vmatpush1.bf16.msra.mxu0 0
        %473 = vmatprep.subr.bf16.mxu0 0
        %474 = vmatpush1.bf16.msra.mxu0 0
        %475 = vmatprep.mubr.bf16.mxu0 0
        %476 = vmatmul.mubr.bf16.gmra.mrb[0].mxu0 %v420
        %v477 = vpop.f32.mrb[0].mxu0
        %v478 = vadd.f32 %v374, %v477
        %v479 = vpop.f32.mrb[0].mxu0
        %v480 = vadd.f32 %v378, %v479
        %v481 = vpop.f32.mrb[0].mxu0
        %v482 = vadd.f32 %v374, %v481
        %v483 = vpop.f32.mrb[0].mxu0
        %v484 = vadd.f32 %v378, %v483
        %485 = vmatprep.mubr.bf16.mxu0 0
        %486 = vmatmul.mubr.bf16.gmra.mrb[0].mxu0 %v423
        %v487 = vpop.f32.mrb[0].mxu0
        %v488 = vadd.f32 %v374, %v487
        %v489 = vpop.f32.mrb[0].mxu0
        %v490 = vadd.f32 %v378, %v489
        %v491 = vpop.f32.mrb[0].mxu0
        %v492 = vadd.f32 %v374, %v491
        %v493 = vpop.f32.mrb[0].mxu0
        %v494 = vadd.f32 %v378, %v493
        %495 = vmatprep.mubr.bf16.mxu0 0
        %496 = vmatmul.mubr.bf16.gmra.mrb[0].mxu0 %v426
        %v497 = vpop.f32.mrb[0].mxu0
        %v498 = vadd.f32 %v374, %v497
        %v499 = vpop.f32.mrb[0].mxu0
        %v500 = vadd.f32 %v378, %v499
        %v501 = vpop.f32.mrb[0].mxu0
        %v502 = vadd.f32 %v374, %v501
        %v503 = vpop.f32.mrb[0].mxu0
        %v504 = vadd.f32 %v378, %v503
        %505 = vmatprep.mubr.bf16.mxu0 0
        %506 = vmatmul.mubr.bf16.gmra.mrb[0].mxu0 %v429
        %v507 = vpop.f32.mrb[0].mxu0
        %v508 = vadd.f32 %v374, %v507
        %v509 = vpop.f32.mrb[0].mxu0
        %v510 = vadd.f32 %v378, %v509
        %v511 = vpop.f32.mrb[0].mxu0
        %v512 = vadd.f32 %v374, %v511
        %v513 = vpop.f32.mrb[0].mxu0
        %v514 = vadd.f32 %v378, %v513
        %515 = vmatprep.mubr.bf16.mxu0 0
        %516 = vmatmul.mubr.bf16.gmra.mrb[0].mxu0 %v432
        %v517 = vpop.f32.mrb[0].mxu0
        %v518 = vadd.f32 %v374, %v517
        %v519 = vpop.f32.mrb[0].mxu0
        %v520 = vadd.f32 %v378, %v519
        %v521 = vpop.f32.mrb[0].mxu0
        %v522 = vadd.f32 %v374, %v521
        %v523 = vpop.f32.mrb[0].mxu0
        %v524 = vadd.f32 %v378, %v523
        %525 = vmatprep.mubr.bf16.mxu0 0
        %526 = vmatmul.mubr.bf16.gmra.mrb[0].mxu0 %v435
        %v527 = vpop.f32.mrb[0].mxu0
        %v528 = vadd.f32 %v374, %v527
        %v529 = vpop.f32.mrb[0].mxu0
        %v530 = vadd.f32 %v378, %v529
        %v531 = vpop.f32.mrb[0].mxu0
        %v532 = vadd.f32 %v374, %v531
        %v533 = vpop.f32.mrb[0].mxu0
        %v534 = vadd.f32 %v378, %v533
        %535 = vmatprep.mubr.bf16.mxu0 0
        %536 = vmatmul.mubr.bf16.gmra.mrb[0].mxu0 %v438
        %v537 = vpop.f32.mrb[0].mxu0
        %v538 = vadd.f32 %v374, %v537
        %v539 = vpop.f32.mrb[0].mxu0
        %v540 = vadd.f32 %v378, %v539
        %v541 = vpop.f32.mrb[0].mxu0
        %v542 = vadd.f32 %v374, %v541
        %v543 = vpop.f32.mrb[0].mxu0
        %v544 = vadd.f32 %v378, %v543
        %545 = vmatprep.mubr.bf16.mxu0 0
        %546 = vmatmul.mubr.bf16.gmra.mrb[0].mxu0 %v441
        %v547 = vpop.f32.mrb[0].mxu0
        %v548 = vadd.f32 %v374, %v547
        %v549 = vpop.f32.mrb[0].mxu0
        %v550 = vadd.f32 %v378, %v549
        %v551 = vpop.f32.mrb[0].mxu0
        %v552 = vadd.f32 %v374, %v551
        %v553 = vpop.f32.mrb[0].mxu0
        %v554 = vadd.f32 %v378, %v553
        %555 = vdwg.mxu0
        %556 = vmatprep.subr.bf16.mxu0 0
        %557 = vmatpush1.bf16.msra.mxu0 %v408
        %558 = vmatprep.subr.bf16.mxu0 0
        %559 = vmatpush1.bf16.msra.mxu0 %v411
        %560 = vmatprep.subr.bf16.mxu0 0
        %561 = vmatpush1.bf16.msra.mxu0 0
        %562 = vmatprep.subr.bf16.mxu0 0
        %563 = vmatpush1.bf16.msra.mxu0 0
        %564 = vmatprep.subr.bf16.mxu0 0
        %565 = vmatpush1.bf16.msra.mxu0 0
        %566 = vmatprep.subr.bf16.mxu0 0
        %567 = vmatpush1.bf16.msra.mxu0 0
        %568 = vmatprep.subr.bf16.mxu0 0
        %569 = vmatpush1.bf16.msra.mxu0 0
        %570 = vmatprep.subr.bf16.mxu0 0
        %571 = vmatpush1.bf16.msra.mxu0 0
        %572 = vmatprep.subr.bf16.mxu0 0
        %573 = vmatpush1.bf16.msra.mxu0 0
        %574 = vmatprep.subr.bf16.mxu0 0
        %575 = vmatpush1.bf16.msra.mxu0 0
        %576 = vmatprep.subr.bf16.mxu0 0
        %577 = vmatpush1.bf16.msra.mxu0 0
        %578 = vmatprep.subr.bf16.mxu0 0
        %579 = vmatpush1.bf16.msra.mxu0 0
        %580 = vmatprep.subr.bf16.mxu0 0
        %581 = vmatpush1.bf16.msra.mxu0 0
        %582 = vmatprep.subr.bf16.mxu0 0
        %583 = vmatpush1.bf16.msra.mxu0 0
        %584 = vmatprep.subr.bf16.mxu0 0
        %585 = vmatpush1.bf16.msra.mxu0 0
        %586 = vmatprep.subr.bf16.mxu0 0
        %587 = vmatpush1.bf16.msra.mxu0 0
        %588 = vmatprep.mubr.bf16.mxu0 0
        %589 = vmatmul.mubr.bf16.gmra.mrb[0].mxu0 %v420
        %v590 = vpop.f32.mrb[0].mxu0
        %v591 = vadd.f32 %v382, %v590
        %v592 = vpop.f32.mrb[0].mxu0
        %v593 = vpop.f32.mrb[0].mxu0
        %v594 = vadd.f32 %v382, %v593
        %v595 = vpop.f32.mrb[0].mxu0
        %596 = vmatprep.mubr.bf16.mxu0 0
        %597 = vmatmul.mubr.bf16.gmra.mrb[0].mxu0 %v423
        %v598 = vpop.f32.mrb[0].mxu0
        %v599 = vadd.f32 %v382, %v598
        %v600 = vpop.f32.mrb[0].mxu0
        %v601 = vpop.f32.mrb[0].mxu0
        %v602 = vadd.f32 %v382, %v601
        %v603 = vpop.f32.mrb[0].mxu0
        %604 = vmatprep.mubr.bf16.mxu0 0
        %605 = vmatmul.mubr.bf16.gmra.mrb[0].mxu0 %v426
        %v606 = vpop.f32.mrb[0].mxu0
        %v607 = vadd.f32 %v382, %v606
        %v608 = vpop.f32.mrb[0].mxu0
        %v609 = vpop.f32.mrb[0].mxu0
        %v610 = vadd.f32 %v382, %v609
        %v611 = vpop.f32.mrb[0].mxu0
        %612 = vmatprep.mubr.bf16.mxu0 0
        %613 = vmatmul.mubr.bf16.gmra.mrb[0].mxu0 %v429
        %v614 = vpop.f32.mrb[0].mxu0
        %v615 = vadd.f32 %v382, %v614
        %v616 = vpop.f32.mrb[0].mxu0
        %v617 = vpop.f32.mrb[0].mxu0
        %v618 = vadd.f32 %v382, %v617
        %v619 = vpop.f32.mrb[0].mxu0
        %620 = vmatprep.mubr.bf16.mxu0 0
        %621 = vmatmul.mubr.bf16.gmra.mrb[0].mxu0 %v432
        %v622 = vpop.f32.mrb[0].mxu0
        %v623 = vadd.f32 %v382, %v622
        %v624 = vpop.f32.mrb[0].mxu0
        %v625 = vpop.f32.mrb[0].mxu0
        %v626 = vadd.f32 %v382, %v625
        %v627 = vpop.f32.mrb[0].mxu0
        %628 = vmatprep.mubr.bf16.mxu0 0
        %629 = vmatmul.mubr.bf16.gmra.mrb[0].mxu0 %v435
        %v630 = vpop.f32.mrb[0].mxu0
        %v631 = vadd.f32 %v382, %v630
        %v632 = vpop.f32.mrb[0].mxu0
        %v633 = vpop.f32.mrb[0].mxu0
        %v634 = vadd.f32 %v382, %v633
        %v635 = vpop.f32.mrb[0].mxu0
        %636 = vmatprep.mubr.bf16.mxu0 0
        %637 = vmatmul.mubr.bf16.gmra.mrb[0].mxu0 %v438
        %v638 = vpop.f32.mrb[0].mxu0
        %v639 = vadd.f32 %v382, %v638
        %v640 = vpop.f32.mrb[0].mxu0
        %v641 = vpop.f32.mrb[0].mxu0
        %v642 = vadd.f32 %v382, %v641
        %v643 = vpop.f32.mrb[0].mxu0
        %644 = vmatprep.mubr.bf16.mxu0 0
        %645 = vmatmul.mubr.bf16.gmra.mrb[0].mxu0 %v441
        %v646 = vpop.f32.mrb[0].mxu0
        %v647 = vadd.f32 %v382, %v646
        %v648 = vpop.f32.mrb[0].mxu0
        %v649 = vpop.f32.mrb[0].mxu0
        %v650 = vadd.f32 %v382, %v649
        %v651 = vpop.f32.mrb[0].mxu0
        %652 = vdwg.mxu0
        %v653 = vmax.f32 %v478, 0.0
        %v654 = vmax.f32 %v480, 0.0
        %v655 = vmax.f32 %v591, 0.0
        %v656 = vmax.f32 %v482, 0.0
        %v657 = vmax.f32 %v484, 0.0
        %v658 = vmax.f32 %v594, 0.0
        %v659 = vmax.f32 %v488, 0.0
        %v660 = vmax.f32 %v490, 0.0
        %v661 = vmax.f32 %v599, 0.0
        %v662 = vmax.f32 %v492, 0.0
        %v663 = vmax.f32 %v494, 0.0
        %v664 = vmax.f32 %v602, 0.0
        %v665 = vmax.f32 %v498, 0.0
        %v666 = vmax.f32 %v500, 0.0
        %v667 = vmax.f32 %v607, 0.0
        %v668 = vmax.f32 %v502, 0.0
        %v669 = vmax.f32 %v504, 0.0
        %v670 = vmax.f32 %v610, 0.0
        %v671 = vmax.f32 %v508, 0.0
        %v672 = vmax.f32 %v510, 0.0
        %v673 = vmax.f32 %v615, 0.0
        %v674 = vmax.f32 %v512, 0.0
        %v675 = vmax.f32 %v514, 0.0
        %v676 = vmax.f32 %v618, 0.0
        %v677 = vmax.f32 %v518, 0.0
        %v678 = vmax.f32 %v520, 0.0
        %v679 = vmax.f32 %v623, 0.0
        %v680 = vmax.f32 %v522, 0.0
        %v681 = vmax.f32 %v524, 0.0
        %v682 = vmax.f32 %v626, 0.0
        %v683 = vmax.f32 %v528, 0.0
        %v684 = vmax.f32 %v530, 0.0
        %v685 = vmax.f32 %v631, 0.0
        %v686 = vmax.f32 %v532, 0.0
        %v687 = vmax.f32 %v534, 0.0
        %v688 = vmax.f32 %v634, 0.0
        %v689 = vmax.f32 %v538, 0.0
        %v690 = vmax.f32 %v540, 0.0
        %v691 = vmax.f32 %v639, 0.0
        %v692 = vmax.f32 %v542, 0.0
        %v693 = vmax.f32 %v544, 0.0
        %v694 = vmax.f32 %v642, 0.0
        %v695 = vmax.f32 %v548, 0.0
        %v696 = vmax.f32 %v550, 0.0
        %v697 = vmax.f32 %v647, 0.0
        %v698 = vmax.f32 %v552, 0.0
        %v699 = vmax.f32 %v554, 0.0
        %v700 = vmax.f32 %v650, 0.0
        %v701 = vld [vmem:[%s3] sm:$0x3]
        %v703 = vlaneseq
        %v704 = vshrl.u32 %v703, 7
        %v705 = vsub.s32 0, %v704
        %v706 = vrot.slane %v701, %v705
        %v707 = vlaneseq
        %v708 = vshrl.u32 %v707, 7
        %v709 = vsub.s32 1, %v708
        %v710 = vrot.slane %v701, %v709
        %v713 = vmul.f32 %v653, %v706
        %v714 = vmul.f32 %v654, %v710
        %v715 = vmul.f32 %v656, %v706
        %v716 = vmul.f32 %v657, %v710
        %v717 = vmul.f32 %v659, %v706
        %v718 = vmul.f32 %v660, %v710
        %v719 = vmul.f32 %v662, %v706
        %v720 = vmul.f32 %v663, %v710
        %v721 = vmul.f32 %v665, %v706
        %v722 = vmul.f32 %v666, %v710
        %v723 = vmul.f32 %v668, %v706
        %v724 = vmul.f32 %v669, %v710
        %v725 = vmul.f32 %v671, %v706
        %v726 = vmul.f32 %v672, %v710
        %v727 = vmul.f32 %v674, %v706
        %v728 = vmul.f32 %v675, %v710
        %v729 = vmul.f32 %v677, %v706
        %v730 = vmul.f32 %v678, %v710
        %v731 = vmul.f32 %v680, %v706
        %v732 = vmul.f32 %v681, %v710
        %v733 = vmul.f32 %v683, %v706
        %v734 = vmul.f32 %v684, %v710
        %v735 = vmul.f32 %v686, %v706
        %v736 = vmul.f32 %v687, %v710
        %v737 = vmul.f32 %v689, %v706
        %v738 = vmul.f32 %v690, %v710
        %v739 = vmul.f32 %v692, %v706
        %v740 = vmul.f32 %v693, %v710
        %v741 = vmul.f32 %v695, %v706
        %v742 = vmul.f32 %v696, %v710
        %v743 = vmul.f32 %v698, %v706
        %v744 = vmul.f32 %v699, %v710
        %v745 = vadd.f32 %v713, %v714
        %746 = vadd.xlane.f32.xlu0 %v745
        %v747 = vpop.xlane.xlu0 %746
        %v748 = vadd.f32 %v715, %v716
        %749 = vadd.xlane.f32.xlu0 %v748
        %v750 = vpop.xlane.xlu0 %749
        %v751 = vadd.f32 %v717, %v718
        %752 = vadd.xlane.f32.xlu0 %v751
        %v753 = vpop.xlane.xlu0 %752
        %v754 = vadd.f32 %v719, %v720
        %755 = vadd.xlane.f32.xlu0 %v754
        %v756 = vpop.xlane.xlu0 %755
        %v757 = vadd.f32 %v721, %v722
        %758 = vadd.xlane.f32.xlu0 %v757
        %v759 = vpop.xlane.xlu0 %758
        %v760 = vadd.f32 %v723, %v724
        %761 = vadd.xlane.f32.xlu0 %v760
        %v762 = vpop.xlane.xlu0 %761
        %v763 = vadd.f32 %v725, %v726
        %764 = vadd.xlane.f32.xlu0 %v763
        %v765 = vpop.xlane.xlu0 %764
        %v766 = vadd.f32 %v727, %v728
        %767 = vadd.xlane.f32.xlu0 %v766
        %v768 = vpop.xlane.xlu0 %767
        %v769 = vadd.f32 %v729, %v730
        %770 = vadd.xlane.f32.xlu0 %v769
        %v771 = vpop.xlane.xlu0 %770
        %v772 = vadd.f32 %v731, %v732
        %773 = vadd.xlane.f32.xlu0 %v772
        %v774 = vpop.xlane.xlu0 %773
        %v775 = vadd.f32 %v733, %v734
        %776 = vadd.xlane.f32.xlu0 %v775
        %v777 = vpop.xlane.xlu0 %776
        %v778 = vadd.f32 %v735, %v736
        %779 = vadd.xlane.f32.xlu0 %v778
        %v780 = vpop.xlane.xlu0 %779
        %v781 = vadd.f32 %v737, %v738
        %782 = vadd.xlane.f32.xlu0 %v781
        %v783 = vpop.xlane.xlu0 %782
        %v784 = vadd.f32 %v739, %v740
        %785 = vadd.xlane.f32.xlu0 %v784
        %v786 = vpop.xlane.xlu0 %785
        %v787 = vadd.f32 %v741, %v742
        %788 = vadd.xlane.f32.xlu0 %v787
        %v789 = vpop.xlane.xlu0 %788
        %v790 = vadd.f32 %v743, %v744
        %791 = vadd.xlane.f32.xlu0 %v790
        %v792 = vpop.xlane.xlu0 %791
        %v793 = vld [vmem:[#allocation2] sm:$0x1]
        %v795 = vlaneseq
        %v796 = vshrl.u32 %v795, 7
        %v797 = vsub.s32 0, %v796
        %v798 = vrot.slane %v793, %v797
        %v800 = vadd.f32 %v747, %v798
        %v801 = vadd.f32 %v750, %v798
        %v802 = vadd.f32 %v753, %v798
        %v803 = vadd.f32 %v756, %v798
        %v804 = vadd.f32 %v759, %v798
        %v805 = vadd.f32 %v762, %v798
        %v806 = vadd.f32 %v765, %v798
        %v807 = vadd.f32 %v768, %v798
        %v808 = vadd.f32 %v771, %v798
        %v809 = vadd.f32 %v774, %v798
        %v810 = vadd.f32 %v777, %v798
        %v811 = vadd.f32 %v780, %v798
        %v812 = vadd.f32 %v783, %v798
        %v813 = vadd.f32 %v786, %v798
        %v814 = vadd.f32 %v789, %v798
        %v815 = vadd.f32 %v792, %v798
        %v816 = vpack.c.bf16 %v658, %v655
        %v817 = vpack.c.bf16 %v664, %v661
        %v818 = vpack.c.bf16 %v670, %v667
        %v819 = vpack.c.bf16 %v676, %v673
        %v820 = vpack.c.bf16 %v682, %v679
        %v821 = vpack.c.bf16 %v688, %v685
        %v822 = vpack.c.bf16 %v694, %v691
        %v823 = vpack.c.bf16 %v700, %v697
        %v824 = vld [vmem:[%s5] sm:$0xff]
        %v825 = vld [vmem:[%s5 + $0x8] sm:$0xff]
        %v826 = vld [vmem:[%s5 + $0x10] sm:$0xff]
        %v827 = vld [vmem:[%s5 + $0x18] sm:$0xff]
        %v828 = vld [vmem:[%s5 + $0x20] sm:$0xff]
        %v829 = vld [vmem:[%s5 + $0x28] sm:$0xff]
        %v830 = vld [vmem:[%s5 + $0x30] sm:$0xff]
        %v831 = vld [vmem:[%s5 + $0x38] sm:$0xff]
        %v832 = vld [vmem:[%s5 + $0x40] sm:$0xff]
        %v833 = vld [vmem:[%s5 + $0x48] sm:$0xff]
        %v834 = vld [vmem:[%s5 + $0x50] sm:$0xff]
        %v835 = vld [vmem:[%s5 + $0x58] sm:$0xff]
        %v836 = vld [vmem:[%s5 + $0x60] sm:$0xff]
        %v837 = vld [vmem:[%s5 + $0x68] sm:$0xff]
        %v838 = vld [vmem:[%s5 + $0x70] sm:$0xff]
        %v839 = vld [vmem:[%s5 + $0x78] sm:$0xff]
        %v840 = vld [vmem:[%s6] sm:$0x3]
        %v842 = vlaneseq
        %v843 = vshrl.u32 %v842, 7
        %v844 = vsub.s32 0, %v843
        %v845 = vrot.slane %v840, %v844
        %v846 = vlaneseq
        %v847 = vshrl.u32 %v846, 7
        %v848 = vsub.s32 1, %v847
        %v849 = vrot.slane %v840, %v848
        %v868 = vunpack.c.l.b16 %v824
        %v869 = vunpack.c.h.b16 %v824
        %v870 = vunpack.c.l.b16 %v825
        %v871 = vunpack.c.h.b16 %v825
        %v872 = vunpack.c.l.b16 %v826
        %v873 = vunpack.c.h.b16 %v826
        %v874 = vunpack.c.l.b16 %v827
        %v875 = vunpack.c.h.b16 %v827
        %v876 = vunpack.c.l.b16 %v828
        %v877 = vunpack.c.h.b16 %v828
        %v878 = vunpack.c.l.b16 %v829
        %v879 = vunpack.c.h.b16 %v829
        %v880 = vunpack.c.l.b16 %v830
        %v881 = vunpack.c.h.b16 %v830
        %v882 = vunpack.c.l.b16 %v831
        %v883 = vunpack.c.h.b16 %v831
        %v884 = vunpack.c.l.b16 %v832
        %v885 = vunpack.c.h.b16 %v832
        %v886 = vunpack.c.l.b16 %v833
        %v887 = vunpack.c.h.b16 %v833
        %v888 = vunpack.c.l.b16 %v834
        %v889 = vunpack.c.h.b16 %v834
        %v890 = vunpack.c.l.b16 %v835
        %v891 = vunpack.c.h.b16 %v835
        %v892 = vunpack.c.l.b16 %v836
        %v893 = vunpack.c.h.b16 %v836
        %v894 = vunpack.c.l.b16 %v837
        %v895 = vunpack.c.h.b16 %v837
        %v896 = vunpack.c.l.b16 %v838
        %v897 = vunpack.c.h.b16 %v838
        %v898 = vunpack.c.l.b16 %v839
        %v899 = vunpack.c.h.b16 %v839
        %v900 = vpack.c.b16 %v870, %v868
        %v901 = vpack.c.b16 %v871, %v869
        %v902 = vpack.c.b16 %v874, %v872
        %v903 = vpack.c.b16 %v875, %v873
        %v904 = vpack.c.b16 %v878, %v876
        %v905 = vpack.c.b16 %v879, %v877
        %v906 = vpack.c.b16 %v882, %v880
        %v907 = vpack.c.b16 %v883, %v881
        %v908 = vpack.c.b16 %v886, %v884
        %v909 = vpack.c.b16 %v887, %v885
        %v910 = vpack.c.b16 %v890, %v888
        %v911 = vpack.c.b16 %v891, %v889
        %v912 = vpack.c.b16 %v894, %v892
        %v913 = vpack.c.b16 %v895, %v893
        %v914 = vpack.c.b16 %v898, %v896
        %v915 = vpack.c.b16 %v899, %v897
        %932 = vmatprep.subr.bf16.mxu0 %v901
        %933 = vmatpush1.bf16.msra.mxu0 %v900
        %934 = vmatprep.subr.bf16.mxu0 %v903
        %935 = vmatpush1.bf16.msra.mxu0 %v902
        %936 = vmatprep.subr.bf16.mxu0 %v905
        %937 = vmatpush1.bf16.msra.mxu0 %v904
        %938 = vmatprep.subr.bf16.mxu0 %v907
        %939 = vmatpush1.bf16.msra.mxu0 %v906
        %940 = vmatprep.subr.bf16.mxu0 %v909
        %941 = vmatpush1.bf16.msra.mxu0 %v908
        %942 = vmatprep.subr.bf16.mxu0 %v911
        %943 = vmatpush1.bf16.msra.mxu0 %v910
        %944 = vmatprep.subr.bf16.mxu0 %v913
        %945 = vmatpush1.bf16.msra.mxu0 %v912
        %946 = vmatprep.subr.bf16.mxu0 %v915
        %947 = vmatpush1.bf16.msra.mxu0 %v914
        %948 = vmatprep.subr.bf16.mxu0 0
        %949 = vmatpush1.bf16.msra.mxu0 0
        %950 = vmatprep.subr.bf16.mxu0 0
        %951 = vmatpush1.bf16.msra.mxu0 0
        %952 = vmatprep.subr.bf16.mxu0 0
        %953 = vmatpush1.bf16.msra.mxu0 0
        %954 = vmatprep.subr.bf16.mxu0 0
        %955 = vmatpush1.bf16.msra.mxu0 0
        %956 = vmatprep.subr.bf16.mxu0 0
        %957 = vmatpush1.bf16.msra.mxu0 0
        %958 = vmatprep.subr.bf16.mxu0 0
        %959 = vmatpush1.bf16.msra.mxu0 0
        %960 = vmatprep.subr.bf16.mxu0 0
        %961 = vmatpush1.bf16.msra.mxu0 0
        %962 = vmatprep.subr.bf16.mxu0 0
        %963 = vmatpush1.bf16.msra.mxu0 0
        %964 = vmatprep.mubr.bf16.mxu0 0
        %965 = vmatmul.mubr.bf16.gmra.mrb[0].mxu0 %v816
        %v966 = vpop.f32.mrb[0].mxu0
        %v967 = vadd.f32 %v845, %v966
        %v968 = vpop.f32.mrb[0].mxu0
        %v969 = vadd.f32 %v849, %v968
        %v970 = vpop.f32.mrb[0].mxu0
        %v971 = vadd.f32 %v845, %v970
        %v972 = vpop.f32.mrb[0].mxu0
        %v973 = vadd.f32 %v849, %v972
        %974 = vmatprep.mubr.bf16.mxu0 0
        %975 = vmatmul.mubr.bf16.gmra.mrb[0].mxu0 %v817
        %v976 = vpop.f32.mrb[0].mxu0
        %v977 = vadd.f32 %v845, %v976
        %v978 = vpop.f32.mrb[0].mxu0
        %v979 = vadd.f32 %v849, %v978
        %v980 = vpop.f32.mrb[0].mxu0
        %v981 = vadd.f32 %v845, %v980
        %v982 = vpop.f32.mrb[0].mxu0
        %v983 = vadd.f32 %v849, %v982
        %984 = vmatprep.mubr.bf16.mxu0 0
        %985 = vmatmul.mubr.bf16.gmra.mrb[0].mxu0 %v818
        %v986 = vpop.f32.mrb[0].mxu0
        %v987 = vadd.f32 %v845, %v986
        %v988 = vpop.f32.mrb[0].mxu0
        %v989 = vadd.f32 %v849, %v988
        %v990 = vpop.f32.mrb[0].mxu0
        %v991 = vadd.f32 %v845, %v990
        %v992 = vpop.f32.mrb[0].mxu0
        %v993 = vadd.f32 %v849, %v992
        %994 = vmatprep.mubr.bf16.mxu0 0
        %995 = vmatmul.mubr.bf16.gmra.mrb[0].mxu0 %v819
        %v996 = vpop.f32.mrb[0].mxu0
        %v997 = vadd.f32 %v845, %v996
        %v998 = vpop.f32.mrb[0].mxu0
        %v999 = vadd.f32 %v849, %v998
        %v1000 = vpop.f32.mrb[0].mxu0
        %v1001 = vadd.f32 %v845, %v1000
        %v1002 = vpop.f32.mrb[0].mxu0
        %v1003 = vadd.f32 %v849, %v1002
        %1004 = vmatprep.mubr.bf16.mxu0 0
        %1005 = vmatmul.mubr.bf16.gmra.mrb[0].mxu0 %v820
        %v1006 = vpop.f32.mrb[0].mxu0
        %v1007 = vadd.f32 %v845, %v1006
        %v1008 = vpop.f32.mrb[0].mxu0
        %v1009 = vadd.f32 %v849, %v1008
        %v1010 = vpop.f32.mrb[0].mxu0
        %v1011 = vadd.f32 %v845, %v1010
        %v1012 = vpop.f32.mrb[0].mxu0
        %v1013 = vadd.f32 %v849, %v1012
        %1014 = vmatprep.mubr.bf16.mxu0 0
        %1015 = vmatmul.mubr.bf16.gmra.mrb[0].mxu0 %v821
        %v1016 = vpop.f32.mrb[0].mxu0
        %v1017 = vadd.f32 %v845, %v1016
        %v1018 = vpop.f32.mrb[0].mxu0
        %v1019 = vadd.f32 %v849, %v1018
        %v1020 = vpop.f32.mrb[0].mxu0
        %v1021 = vadd.f32 %v845, %v1020
        %v1022 = vpop.f32.mrb[0].mxu0
        %v1023 = vadd.f32 %v849, %v1022
        %1024 = vmatprep.mubr.bf16.mxu0 0
        %1025 = vmatmul.mubr.bf16.gmra.mrb[0].mxu0 %v822
        %v1026 = vpop.f32.mrb[0].mxu0
        %v1027 = vadd.f32 %v845, %v1026
        %v1028 = vpop.f32.mrb[0].mxu0
        %v1029 = vadd.f32 %v849, %v1028
        %v1030 = vpop.f32.mrb[0].mxu0
        %v1031 = vadd.f32 %v845, %v1030
        %v1032 = vpop.f32.mrb[0].mxu0
        %v1033 = vadd.f32 %v849, %v1032
        %1034 = vmatprep.mubr.bf16.mxu0 0
        %1035 = vmatmul.mubr.bf16.gmra.mrb[0].mxu0 %v823
        %v1036 = vpop.f32.mrb[0].mxu0
        %v1037 = vadd.f32 %v845, %v1036
        %v1038 = vpop.f32.mrb[0].mxu0
        %v1039 = vadd.f32 %v849, %v1038
        %v1040 = vpop.f32.mrb[0].mxu0
        %v1041 = vadd.f32 %v845, %v1040
        %v1042 = vpop.f32.mrb[0].mxu0
        %v1043 = vadd.f32 %v849, %v1042
        %1044 = vdwg.mxu0
        %v1045 = vmax.f32 %v967, 0.0
        %v1046 = vmax.f32 %v969, 0.0
        %v1047 = vmax.f32 %v971, 0.0
        %v1048 = vmax.f32 %v973, 0.0
        %v1049 = vmax.f32 %v977, 0.0
        %v1050 = vmax.f32 %v979, 0.0
        %v1051 = vmax.f32 %v981, 0.0
        %v1052 = vmax.f32 %v983, 0.0
        %v1053 = vmax.f32 %v987, 0.0
        %v1054 = vmax.f32 %v989, 0.0
        %v1055 = vmax.f32 %v991, 0.0
        %v1056 = vmax.f32 %v993, 0.0
        %v1057 = vmax.f32 %v997, 0.0
        %v1058 = vmax.f32 %v999, 0.0
        %v1059 = vmax.f32 %v1001, 0.0
        %v1060 = vmax.f32 %v1003, 0.0
        %v1061 = vmax.f32 %v1007, 0.0
        %v1062 = vmax.f32 %v1009, 0.0
        %v1063 = vmax.f32 %v1011, 0.0
        %v1064 = vmax.f32 %v1013, 0.0
        %v1065 = vmax.f32 %v1017, 0.0
        %v1066 = vmax.f32 %v1019, 0.0
        %v1067 = vmax.f32 %v1021, 0.0
        %v1068 = vmax.f32 %v1023, 0.0
        %v1069 = vmax.f32 %v1027, 0.0
        %v1070 = vmax.f32 %v1029, 0.0
        %v1071 = vmax.f32 %v1031, 0.0
        %v1072 = vmax.f32 %v1033, 0.0
        %v1073 = vmax.f32 %v1037, 0.0
        %v1074 = vmax.f32 %v1039, 0.0
        %v1075 = vmax.f32 %v1041, 0.0
        %v1076 = vmax.f32 %v1043, 0.0
        %v1077 = vpack.c.bf16 %v1047, %v1045
        %v1078 = vpack.c.bf16 %v1048, %v1046
        %v1079 = vpack.c.bf16 %v1051, %v1049
        %v1080 = vpack.c.bf16 %v1052, %v1050
        %v1081 = vpack.c.bf16 %v1055, %v1053
        %v1082 = vpack.c.bf16 %v1056, %v1054
        %v1083 = vpack.c.bf16 %v1059, %v1057
        %v1084 = vpack.c.bf16 %v1060, %v1058
        %v1085 = vpack.c.bf16 %v1063, %v1061
        %v1086 = vpack.c.bf16 %v1064, %v1062
        %v1087 = vpack.c.bf16 %v1067, %v1065
        %v1088 = vpack.c.bf16 %v1068, %v1066
        %v1089 = vpack.c.bf16 %v1071, %v1069
        %v1090 = vpack.c.bf16 %v1072, %v1070
        %v1091 = vpack.c.bf16 %v1075, %v1073
        %v1092 = vpack.c.bf16 %v1076, %v1074
        %v1093 = vld [vmem:[%s7] sm:$0xf]
        %v1094 = vld [vmem:[%s7 + $0x4] sm:$0xf]
        %v1095 = vld [vmem:[%s7 + $0x8] sm:$0xf]
        %v1096 = vld [vmem:[%s7 + $0xc] sm:$0xf]
        %v1097 = vld [vmem:[%s7 + $0x10] sm:$0xf]
        %v1098 = vld [vmem:[%s7 + $0x14] sm:$0xf]
        %v1099 = vld [vmem:[%s7 + $0x18] sm:$0xf]
        %v1100 = vld [vmem:[%s7 + $0x1c] sm:$0xf]
        %v1101 = vld [vmem:[%s7 + $0x20] sm:$0xf]
        %v1102 = vld [vmem:[%s7 + $0x24] sm:$0xf]
        %v1103 = vld [vmem:[%s7 + $0x28] sm:$0xf]
        %v1104 = vld [vmem:[%s7 + $0x2c] sm:$0xf]
        %v1105 = vld [vmem:[%s7 + $0x30] sm:$0xf]
        %v1106 = vld [vmem:[%s7 + $0x34] sm:$0xf]
        %v1107 = vld [vmem:[%s7 + $0x38] sm:$0xf]
        %v1108 = vld [vmem:[%s7 + $0x3c] sm:$0xf]
        %v1109 = vld [vmem:[%s7 + $0x40] sm:$0xf]
        %v1110 = vld [vmem:[%s7 + $0x44] sm:$0xf]
        %v1111 = vld [vmem:[%s7 + $0x48] sm:$0xf]
        %v1112 = vld [vmem:[%s7 + $0x4c] sm:$0xf]
        %v1113 = vld [vmem:[%s7 + $0x50] sm:$0xf]
        %v1114 = vld [vmem:[%s7 + $0x54] sm:$0xf]
        %v1115 = vld [vmem:[%s7 + $0x58] sm:$0xf]
        %v1116 = vld [vmem:[%s7 + $0x5c] sm:$0xf]
        %v1117 = vld [vmem:[%s7 + $0x60] sm:$0xf]
        %v1118 = vld [vmem:[%s7 + $0x64] sm:$0xf]
        %v1119 = vld [vmem:[%s7 + $0x68] sm:$0xf]
        %v1120 = vld [vmem:[%s7 + $0x6c] sm:$0xf]
        %v1121 = vld [vmem:[%s7 + $0x70] sm:$0xf]
        %v1122 = vld [vmem:[%s7 + $0x74] sm:$0xf]
        %v1123 = vld [vmem:[%s7 + $0x78] sm:$0xf]
        %v1124 = vld [vmem:[%s7 + $0x7c] sm:$0xf]
        %v1125 = vld [vmem:[%s8] sm:$0x1]
        %v1127 = vlaneseq
        %v1128 = vshrl.u32 %v1127, 7
        %v1129 = vsub.s32 0, %v1128
        %v1130 = vrot.slane %v1125, %v1129
        %v1164 = vunpack.c.l.b16 %v1093
        %v1165 = vunpack.c.l.b16 %v1094
        %v1166 = vunpack.c.l.b16 %v1095
        %v1167 = vunpack.c.l.b16 %v1096
        %v1168 = vunpack.c.l.b16 %v1097
        %v1169 = vunpack.c.l.b16 %v1098
        %v1170 = vunpack.c.l.b16 %v1099
        %v1171 = vunpack.c.l.b16 %v1100
        %v1172 = vunpack.c.l.b16 %v1101
        %v1173 = vunpack.c.l.b16 %v1102
        %v1174 = vunpack.c.l.b16 %v1103
        %v1175 = vunpack.c.l.b16 %v1104
        %v1176 = vunpack.c.l.b16 %v1105
        %v1177 = vunpack.c.l.b16 %v1106
        %v1178 = vunpack.c.l.b16 %v1107
        %v1179 = vunpack.c.l.b16 %v1108
        %v1180 = vunpack.c.l.b16 %v1109
        %v1181 = vunpack.c.l.b16 %v1110
        %v1182 = vunpack.c.l.b16 %v1111
        %v1183 = vunpack.c.l.b16 %v1112
        %v1184 = vunpack.c.l.b16 %v1113
        %v1185 = vunpack.c.l.b16 %v1114
        %v1186 = vunpack.c.l.b16 %v1115
        %v1187 = vunpack.c.l.b16 %v1116
        %v1188 = vunpack.c.l.b16 %v1117
        %v1189 = vunpack.c.l.b16 %v1118
        %v1190 = vunpack.c.l.b16 %v1119
        %v1191 = vunpack.c.l.b16 %v1120
        %v1192 = vunpack.c.l.b16 %v1121
        %v1193 = vunpack.c.l.b16 %v1122
        %v1194 = vunpack.c.l.b16 %v1123
        %v1195 = vunpack.c.l.b16 %v1124
        %v1196 = vpack.c.b16 %v1165, %v1164
        %v1197 = vpack.c.b16 %v1167, %v1166
        %v1198 = vpack.c.b16 %v1169, %v1168
        %v1199 = vpack.c.b16 %v1171, %v1170
        %v1200 = vpack.c.b16 %v1173, %v1172
        %v1201 = vpack.c.b16 %v1175, %v1174
        %v1202 = vpack.c.b16 %v1177, %v1176
        %v1203 = vpack.c.b16 %v1179, %v1178
        %v1204 = vpack.c.b16 %v1181, %v1180
        %v1205 = vpack.c.b16 %v1183, %v1182
        %v1206 = vpack.c.b16 %v1185, %v1184
        %v1207 = vpack.c.b16 %v1187, %v1186
        %v1208 = vpack.c.b16 %v1189, %v1188
        %v1209 = vpack.c.b16 %v1191, %v1190
        %v1210 = vpack.c.b16 %v1193, %v1192
        %v1211 = vpack.c.b16 %v1195, %v1194
        %1228 = vmatprep.subr.bf16.mxu0 0
        %1229 = vmatpush1.bf16.msra.mxu0 %v1196
        %1230 = vmatprep.subr.bf16.mxu0 0
        %1231 = vmatpush1.bf16.msra.mxu0 %v1197
        %1232 = vmatprep.subr.bf16.mxu0 0
        %1233 = vmatpush1.bf16.msra.mxu0 %v1198
        %1234 = vmatprep.subr.bf16.mxu0 0
        %1235 = vmatpush1.bf16.msra.mxu0 %v1199
        %1236 = vmatprep.subr.bf16.mxu0 0
        %1237 = vmatpush1.bf16.msra.mxu0 %v1200
        %1238 = vmatprep.subr.bf16.mxu0 0
        %1239 = vmatpush1.bf16.msra.mxu0 %v1201
        %1240 = vmatprep.subr.bf16.mxu0 0
        %1241 = vmatpush1.bf16.msra.mxu0 %v1202
        %1242 = vmatprep.subr.bf16.mxu0 0
        %1243 = vmatpush1.bf16.msra.mxu0 %v1203
        %1244 = vmatprep.subr.bf16.mxu0 0
        %1245 = vmatpush1.bf16.msra.mxu0 %v1204
        %1246 = vmatprep.subr.bf16.mxu0 0
        %1247 = vmatpush1.bf16.msra.mxu0 %v1205
        %1248 = vmatprep.subr.bf16.mxu0 0
        %1249 = vmatpush1.bf16.msra.mxu0 %v1206
        %1250 = vmatprep.subr.bf16.mxu0 0
        %1251 = vmatpush1.bf16.msra.mxu0 %v1207
        %1252 = vmatprep.subr.bf16.mxu0 0
        %1253 = vmatpush1.bf16.msra.mxu0 %v1208
        %1254 = vmatprep.subr.bf16.mxu0 0
        %1255 = vmatpush1.bf16.msra.mxu0 %v1209
        %1256 = vmatprep.subr.bf16.mxu0 0
        %1257 = vmatpush1.bf16.msra.mxu0 %v1210
        %1258 = vmatprep.subr.bf16.mxu0 0
        %1259 = vmatpush1.bf16.msra.mxu0 %v1211
        %1260 = vmatprep.mubr.bf16.mxu0 %v1078
        %1261 = vmatmul.mubr.bf16.gmra.mrb[0].mxu0 %v1077
        %v1262 = vpop.f32.mrb[0].mxu0
        %v1263 = vadd.f32 %v1130, %v1262
        %v1264 = vpop.f32.mrb[0].mxu0
        %v1265 = vpop.f32.mrb[0].mxu0
        %v1266 = vadd.f32 %v1130, %v1265
        %v1267 = vpop.f32.mrb[0].mxu0
        %1268 = vmatprep.mubr.bf16.mxu0 %v1080
        %1269 = vmatmul.mubr.bf16.gmra.mrb[0].mxu0 %v1079
        %v1270 = vpop.f32.mrb[0].mxu0
        %v1271 = vadd.f32 %v1130, %v1270
        %v1272 = vpop.f32.mrb[0].mxu0
        %v1273 = vpop.f32.mrb[0].mxu0
        %v1274 = vadd.f32 %v1130, %v1273
        %v1275 = vpop.f32.mrb[0].mxu0
        %1276 = vmatprep.mubr.bf16.mxu0 %v1082
        %1277 = vmatmul.mubr.bf16.gmra.mrb[0].mxu0 %v1081
        %v1278 = vpop.f32.mrb[0].mxu0
        %v1279 = vadd.f32 %v1130, %v1278
        %v1280 = vpop.f32.mrb[0].mxu0
        %v1281 = vpop.f32.mrb[0].mxu0
        %v1282 = vadd.f32 %v1130, %v1281
        %v1283 = vpop.f32.mrb[0].mxu0
        %1284 = vmatprep.mubr.bf16.mxu0 %v1084
        %1285 = vmatmul.mubr.bf16.gmra.mrb[0].mxu0 %v1083
        %v1286 = vpop.f32.mrb[0].mxu0
        %v1287 = vadd.f32 %v1130, %v1286
        %v1288 = vpop.f32.mrb[0].mxu0
        %v1289 = vpop.f32.mrb[0].mxu0
        %v1290 = vadd.f32 %v1130, %v1289
        %v1291 = vpop.f32.mrb[0].mxu0
        %1292 = vmatprep.mubr.bf16.mxu0 %v1086
        %1293 = vmatmul.mubr.bf16.gmra.mrb[0].mxu0 %v1085
        %v1294 = vpop.f32.mrb[0].mxu0
        %v1295 = vadd.f32 %v1130, %v1294
        %v1296 = vpop.f32.mrb[0].mxu0
        %v1297 = vpop.f32.mrb[0].mxu0
        %v1298 = vadd.f32 %v1130, %v1297
        %v1299 = vpop.f32.mrb[0].mxu0
        %1300 = vmatprep.mubr.bf16.mxu0 %v1088
        %1301 = vmatmul.mubr.bf16.gmra.mrb[0].mxu0 %v1087
        %v1302 = vpop.f32.mrb[0].mxu0
        %v1303 = vadd.f32 %v1130, %v1302
        %v1304 = vpop.f32.mrb[0].mxu0
        %v1305 = vpop.f32.mrb[0].mxu0
        %v1306 = vadd.f32 %v1130, %v1305
        %v1307 = vpop.f32.mrb[0].mxu0
        %1308 = vmatprep.mubr.bf16.mxu0 %v1090
        %1309 = vmatmul.mubr.bf16.gmra.mrb[0].mxu0 %v1089
        %v1310 = vpop.f32.mrb[0].mxu0
        %v1311 = vadd.f32 %v1130, %v1310
        %v1312 = vpop.f32.mrb[0].mxu0
        %v1313 = vpop.f32.mrb[0].mxu0
        %v1314 = vadd.f32 %v1130, %v1313
        %v1315 = vpop.f32.mrb[0].mxu0
        %1316 = vmatprep.mubr.bf16.mxu0 %v1092
        %1317 = vmatmul.mubr.bf16.gmra.mrb[0].mxu0 %v1091
        %v1318 = vpop.f32.mrb[0].mxu0
        %v1319 = vadd.f32 %v1130, %v1318
        %v1320 = vpop.f32.mrb[0].mxu0
        %v1321 = vpop.f32.mrb[0].mxu0
        %v1322 = vadd.f32 %v1130, %v1321
        %v1323 = vpop.f32.mrb[0].mxu0
        %1324 = vdwg.mxu0
        %1325 = vmax.xlane.f32.xlu0 %v1263
        %v1326 = vpop.xlane.xlu0 %1325
        %1327 = vmax.xlane.f32.xlu0 %v1266
        %v1328 = vpop.xlane.xlu0 %1327
        %1329 = vmax.xlane.f32.xlu0 %v1271
        %v1330 = vpop.xlane.xlu0 %1329
        %1331 = vmax.xlane.f32.xlu0 %v1274
        %v1332 = vpop.xlane.xlu0 %1331
        %1333 = vmax.xlane.f32.xlu0 %v1279
        %v1334 = vpop.xlane.xlu0 %1333
        %1335 = vmax.xlane.f32.xlu0 %v1282
        %v1336 = vpop.xlane.xlu0 %1335
        %1337 = vmax.xlane.f32.xlu0 %v1287
        %v1338 = vpop.xlane.xlu0 %1337
        %1339 = vmax.xlane.f32.xlu0 %v1290
        %v1340 = vpop.xlane.xlu0 %1339
        %1341 = vmax.xlane.f32.xlu0 %v1295
        %v1342 = vpop.xlane.xlu0 %1341
        %1343 = vmax.xlane.f32.xlu0 %v1298
        %v1344 = vpop.xlane.xlu0 %1343
        %1345 = vmax.xlane.f32.xlu0 %v1303
        %v1346 = vpop.xlane.xlu0 %1345
        %1347 = vmax.xlane.f32.xlu0 %v1306
        %v1348 = vpop.xlane.xlu0 %1347
        %1349 = vmax.xlane.f32.xlu0 %v1311
        %v1350 = vpop.xlane.xlu0 %1349
        %1351 = vmax.xlane.f32.xlu0 %v1314
        %v1352 = vpop.xlane.xlu0 %1351
        %1353 = vmax.xlane.f32.xlu0 %v1319
        %v1354 = vpop.xlane.xlu0 %1353
        %1355 = vmax.xlane.f32.xlu0 %v1322
        %v1356 = vpop.xlane.xlu0 %1355
        %v1357 = vsub.f32 %v1263, %v1326
        %v1358 = vsub.f32 %v1266, %v1328
        %v1359 = vsub.f32 %v1271, %v1330
        %v1360 = vsub.f32 %v1274, %v1332
        %v1361 = vsub.f32 %v1279, %v1334
        %v1362 = vsub.f32 %v1282, %v1336
        %v1363 = vsub.f32 %v1287, %v1338
        %v1364 = vsub.f32 %v1290, %v1340
        %v1365 = vsub.f32 %v1295, %v1342
        %v1366 = vsub.f32 %v1298, %v1344
        %v1367 = vsub.f32 %v1303, %v1346
        %v1368 = vsub.f32 %v1306, %v1348
        %v1369 = vsub.f32 %v1311, %v1350
        %v1370 = vsub.f32 %v1314, %v1352
        %v1371 = vsub.f32 %v1319, %v1354
        %v1372 = vsub.f32 %v1322, %v1356
        %v1373 = vmul.f32 %v1357, 1.442695
        %v1374 = vpow.pop %v1373
        %v1375 = vmul.f32 %v1358, 1.442695
        %v1376 = vpow.pop %v1375
        %v1377 = vmul.f32 %v1359, 1.442695
        %v1378 = vpow.pop %v1377
        %v1379 = vmul.f32 %v1360, 1.442695
        %v1380 = vpow.pop %v1379
        %v1381 = vmul.f32 %v1361, 1.442695
        %v1382 = vpow.pop %v1381
        %v1383 = vmul.f32 %v1362, 1.442695
        %v1384 = vpow.pop %v1383
        %v1385 = vmul.f32 %v1363, 1.442695
        %v1386 = vpow.pop %v1385
        %v1387 = vmul.f32 %v1364, 1.442695
        %v1388 = vpow.pop %v1387
        %v1389 = vmul.f32 %v1365, 1.442695
        %v1390 = vpow.pop %v1389
        %v1391 = vmul.f32 %v1366, 1.442695
        %v1392 = vpow.pop %v1391
        %v1393 = vmul.f32 %v1367, 1.442695
        %v1394 = vpow.pop %v1393
        %v1395 = vmul.f32 %v1368, 1.442695
        %v1396 = vpow.pop %v1395
        %v1397 = vmul.f32 %v1369, 1.442695
        %v1398 = vpow.pop %v1397
        %v1399 = vmul.f32 %v1370, 1.442695
        %v1400 = vpow.pop %v1399
        %v1401 = vmul.f32 %v1371, 1.442695
        %v1402 = vpow.pop %v1401
        %v1403 = vmul.f32 %v1372, 1.442695
        %v1404 = vpow.pop %v1403
        %1405 = vadd.xlane.f32.xlu0 %v1374
        %v1406 = vpop.xlane.xlu0 %1405
        %1407 = vadd.xlane.f32.xlu0 %v1376
        %v1408 = vpop.xlane.xlu0 %1407
        %1409 = vadd.xlane.f32.xlu0 %v1378
        %v1410 = vpop.xlane.xlu0 %1409
        %1411 = vadd.xlane.f32.xlu0 %v1380
        %v1412 = vpop.xlane.xlu0 %1411
        %1413 = vadd.xlane.f32.xlu0 %v1382
        %v1414 = vpop.xlane.xlu0 %1413
        %1415 = vadd.xlane.f32.xlu0 %v1384
        %v1416 = vpop.xlane.xlu0 %1415
        %1417 = vadd.xlane.f32.xlu0 %v1386
        %v1418 = vpop.xlane.xlu0 %1417
        %1419 = vadd.xlane.f32.xlu0 %v1388
        %v1420 = vpop.xlane.xlu0 %1419
        %1421 = vadd.xlane.f32.xlu0 %v1390
        %v1422 = vpop.xlane.xlu0 %1421
        %1423 = vadd.xlane.f32.xlu0 %v1392
        %v1424 = vpop.xlane.xlu0 %1423
        %1425 = vadd.xlane.f32.xlu0 %v1394
        %v1426 = vpop.xlane.xlu0 %1425
        %1427 = vadd.xlane.f32.xlu0 %v1396
        %v1428 = vpop.xlane.xlu0 %1427
        %1429 = vadd.xlane.f32.xlu0 %v1398
        %v1430 = vpop.xlane.xlu0 %1429
        %1431 = vadd.xlane.f32.xlu0 %v1400
        %v1432 = vpop.xlane.xlu0 %1431
        %1433 = vadd.xlane.f32.xlu0 %v1402
        %v1434 = vpop.xlane.xlu0 %1433
        %1435 = vadd.xlane.f32.xlu0 %v1404
        %v1436 = vpop.xlane.xlu0 %1435
        %v1437 = vrcp.pop %v1406
        %v1438 = vmul.f32 1.0, %v1437
        %v1439 = vrcp.pop %v1408
        %v1440 = vmul.f32 1.0, %v1439
        %v1441 = vrcp.pop %v1410
        %v1442 = vmul.f32 1.0, %v1441
        %v1443 = vrcp.pop %v1412
        %v1444 = vmul.f32 1.0, %v1443
        %v1445 = vrcp.pop %v1414
        %v1446 = vmul.f32 1.0, %v1445
        %v1447 = vrcp.pop %v1416
        %v1448 = vmul.f32 1.0, %v1447
        %v1449 = vrcp.pop %v1418
        %v1450 = vmul.f32 1.0, %v1449
        %v1451 = vrcp.pop %v1420
        %v1452 = vmul.f32 1.0, %v1451
        %v1453 = vrcp.pop %v1422
        %v1454 = vmul.f32 1.0, %v1453
        %v1455 = vrcp.pop %v1424
        %v1456 = vmul.f32 1.0, %v1455
        %v1457 = vrcp.pop %v1426
        %v1458 = vmul.f32 1.0, %v1457
        %v1459 = vrcp.pop %v1428
        %v1460 = vmul.f32 1.0, %v1459
        %v1461 = vrcp.pop %v1430
        %v1462 = vmul.f32 1.0, %v1461
        %v1463 = vrcp.pop %v1432
        %v1464 = vmul.f32 1.0, %v1463
        %v1465 = vrcp.pop %v1434
        %v1466 = vmul.f32 1.0, %v1465
        %v1467 = vrcp.pop %v1436
        %v1468 = vmul.f32 1.0, %v1467
        %v1469 = vmul.f32 %v1374, %v1438
        %v1470 = vmul.f32 %v1376, %v1440
        %v1471 = vmul.f32 %v1378, %v1442
        %v1472 = vmul.f32 %v1380, %v1444
        %v1473 = vmul.f32 %v1382, %v1446
        %v1474 = vmul.f32 %v1384, %v1448
        %v1475 = vmul.f32 %v1386, %v1450
        %v1476 = vmul.f32 %v1388, %v1452
        %v1477 = vmul.f32 %v1390, %v1454
        %v1478 = vmul.f32 %v1392, %v1456
        %v1479 = vmul.f32 %v1394, %v1458
        %v1480 = vmul.f32 %v1396, %v1460
        %v1481 = vmul.f32 %v1398, %v1462
        %v1482 = vmul.f32 %v1400, %v1464
        %v1483 = vmul.f32 %v1402, %v1466
        %v1484 = vmul.f32 %v1404, %v1468
        %v1485 = vlaneseq
        %v1486 = vand.u32 %v1485, 127
        %vm1487 = vcmp.eq.s32.totalorder %v1486, 127
        %v1488 = vsel %vm1487, 1, 0
        %v1489 = vcvt.s32.f32 %v1488
        %1491 = vset.pattern.permute.xlu0 0
        %1492 = vperm.xlu0 %1491, %v800
        %v1493 = vpop.permute.xlu0 %1492
        %1496 = vset.pattern.permute.xlu0 0
        %1497 = vperm.xlu0 %1496, %v801
        %v1498 = vpop.permute.xlu0 %1497
        %1501 = vset.pattern.permute.xlu0 0
        %1502 = vperm.xlu0 %1501, %v802
        %v1503 = vpop.permute.xlu0 %1502
        %1506 = vset.pattern.permute.xlu0 0
        %1507 = vperm.xlu0 %1506, %v803
        %v1508 = vpop.permute.xlu0 %1507
        %1511 = vset.pattern.permute.xlu0 0
        %1512 = vperm.xlu0 %1511, %v804
        %v1513 = vpop.permute.xlu0 %1512
        %1516 = vset.pattern.permute.xlu0 0
        %1517 = vperm.xlu0 %1516, %v805
        %v1518 = vpop.permute.xlu0 %1517
        %1521 = vset.pattern.permute.xlu0 0
        %1522 = vperm.xlu0 %1521, %v806
        %v1523 = vpop.permute.xlu0 %1522
        %1526 = vset.pattern.permute.xlu0 0
        %1527 = vperm.xlu0 %1526, %v807
        %v1528 = vpop.permute.xlu0 %1527
        %1531 = vset.pattern.permute.xlu0 0
        %1532 = vperm.xlu0 %1531, %v808
        %v1533 = vpop.permute.xlu0 %1532
        %1536 = vset.pattern.permute.xlu0 0
        %1537 = vperm.xlu0 %1536, %v809
        %v1538 = vpop.permute.xlu0 %1537
        %1541 = vset.pattern.permute.xlu0 0
        %1542 = vperm.xlu0 %1541, %v810
        %v1543 = vpop.permute.xlu0 %1542
        %1546 = vset.pattern.permute.xlu0 0
        %1547 = vperm.xlu0 %1546, %v811
        %v1548 = vpop.permute.xlu0 %1547
        %1551 = vset.pattern.permute.xlu0 0
        %1552 = vperm.xlu0 %1551, %v812
        %v1553 = vpop.permute.xlu0 %1552
        %1556 = vset.pattern.permute.xlu0 0
        %1557 = vperm.xlu0 %1556, %v813
        %v1558 = vpop.permute.xlu0 %1557
        %1561 = vset.pattern.permute.xlu0 0
        %1562 = vperm.xlu0 %1561, %v814
        %v1563 = vpop.permute.xlu0 %1562
        %1566 = vset.pattern.permute.xlu0 0
        %1567 = vperm.xlu0 %1566, %v815
        %v1568 = vpop.permute.xlu0 %1567
        %v1570 = vmul.f32 %v1493, %v1489
        %v1571 = vmul.f32 %v1498, %v1489
        %v1572 = vmul.f32 %v1503, %v1489
        %v1573 = vmul.f32 %v1508, %v1489
        %v1574 = vmul.f32 %v1513, %v1489
        %v1575 = vmul.f32 %v1518, %v1489
        %v1576 = vmul.f32 %v1523, %v1489
        %v1577 = vmul.f32 %v1528, %v1489
        %v1578 = vmul.f32 %v1533, %v1489
        %v1579 = vmul.f32 %v1538, %v1489
        %v1580 = vmul.f32 %v1543, %v1489
        %v1581 = vmul.f32 %v1548, %v1489
        %v1582 = vmul.f32 %v1553, %v1489
        %v1583 = vmul.f32 %v1558, %v1489
        %v1584 = vmul.f32 %v1563, %v1489
        %v1585 = vmul.f32 %v1568, %v1489
        %v1586 = vadd.f32 %v1469, %v1570
        %v1587 = vadd.f32 %v1470, %v1571
        %v1588 = vadd.f32 %v1471, %v1572
        %v1589 = vadd.f32 %v1472, %v1573
        %v1590 = vadd.f32 %v1473, %v1574
        %v1591 = vadd.f32 %v1474, %v1575
        %v1592 = vadd.f32 %v1475, %v1576
        %v1593 = vadd.f32 %v1476, %v1577
        %v1594 = vadd.f32 %v1477, %v1578
        %v1595 = vadd.f32 %v1478, %v1579
        %v1596 = vadd.f32 %v1479, %v1580
        %v1597 = vadd.f32 %v1480, %v1581
        %v1598 = vadd.f32 %v1481, %v1582
        %v1599 = vadd.f32 %v1482, %v1583
        %v1600 = vadd.f32 %v1483, %v1584
        %v1601 = vadd.f32 %v1484, %v1585
        %1602 = vst [vmem:[%s328] sm:$0xff] %v1586
        %1603 = vst [vmem:[%s328 + $0x8] sm:$0xff] %v1587
        %1604 = vst [vmem:[%s328 + $0x10] sm:$0xff] %v1588
        %1605 = vst [vmem:[%s328 + $0x18] sm:$0xff] %v1589
        %1606 = vst [vmem:[%s328 + $0x20] sm:$0xff] %v1590
        %1607 = vst [vmem:[%s328 + $0x28] sm:$0xff] %v1591
        %1608 = vst [vmem:[%s328 + $0x30] sm:$0xff] %v1592
        %1609 = vst [vmem:[%s328 + $0x38] sm:$0xff] %v1593
        %1610 = vst [vmem:[%s328 + $0x40] sm:$0xff] %v1594
        %1611 = vst [vmem:[%s328 + $0x48] sm:$0xff] %v1595
        %1612 = vst [vmem:[%s328 + $0x50] sm:$0xff] %v1596
        %1613 = vst [vmem:[%s328 + $0x58] sm:$0xff] %v1597
        %1614 = vst [vmem:[%s328 + $0x60] sm:$0xff] %v1598
        %1615 = vst [vmem:[%s328 + $0x68] sm:$0xff] %v1599
        %1616 = vst [vmem:[%s328 + $0x70] sm:$0xff] %v1600
        %1617 = vst [vmem:[%s328 + $0x78] sm:$0xff] %v1601
        %s1618 = sand.u32 %s227, 1
        %s1619 = scalar_lea.sflag [#allocation4], %s1618
        %s1620 = sand.u32 %s227, 1
        %s1621 = smul.addr %s1620, 128
        %s1622 = scalar_lea.vmem [#allocation3], %s1621
        // Predicated region
        $region57: #{tpu_custom_call.1} parent=55 // pred_check
          %p1623 = pneg %p237
        $region58: #{tpu_custom_call.1} parent=55 // pred_check_branch
          %1625 = sbr.rel (%p1623) target = $region60
        $region59: #{tpu_custom_call.1} parent=55 // pred_region
          %s1626 = smul.u32 16, %s25
          %s1628 = ssub.s32 2048, 2048
          %1629 = vsyncadd %s1619, %s1628
          %s1630 = smul.addr %s1626, 128
          %s1631 = scalar_lea.hbm %s9, %s1630
          %s1632 = sshll.u32 %s1622, 4
          %s1633 = int_to_ptr.vmem [resolvable:$true] %s1632
          %1638 = dma.vmem_to_hbm [thread:$0]  %s1633, 2048, %s1631, %s1619, 128, 128, 8
        $region60: #{tpu_custom_call.1} parent=55 // pred_fallthru
          _
      $region56: #{tpu_custom_call.1} parent=5 // pred_fallthru
        _
      %p1639 = scmp.le.s32.totalorder 2, %s20
      // Predicated region
      $region61: #{tpu_custom_call.1} parent=5 // pred_check
        %p1640 = pneg %p1639
      $region62: #{tpu_custom_call.1} parent=5 // pred_check_branch
        %1642 = sbr.rel (%p1640) target = $region64
      $region63: #{tpu_custom_call.1} parent=5 // pred_region
        %s1643 = ssub.s32 %s20, 2
        // Predicated region
        $region65: #{tpu_custom_call.1} parent=63 // pred_check
          %p1644 = pneg %p243
        $region66: #{tpu_custom_call.1} parent=63 // pred_check_branch
          %1646 = sbr.rel (%p1644) target = $region68
        $region67: #{tpu_custom_call.1} parent=63 // pred_region
          %s1647 = sand.u32 %s228, 1
          %s1648 = scalar_lea.sflag [#allocation4], %s1647
          %s1649 = sand.u32 %s228, 1
          %s1650 = smul.addr %s1649, 128
          %s1651 = scalar_lea.vmem [#allocation3], %s1650
          %1652 = dma.done %s1648, 2048
        $region68: #{tpu_custom_call.1} parent=63 // pred_fallthru
          _
      $region64: #{tpu_custom_call.1} parent=5 // pred_fallthru
        _
    $region6: #{tpu_custom_call.1} parent=1 // loop_footer
      %s24 = sadd.s32 1, %s20
    $region7: #{tpu_custom_call.1} parent=1 // loop_footer_branch
      %19 = sbr.rel target = $region3
    $region8: #{tpu_custom_call.1} parent=1 // loop_exit
      _
    %1653 = vsyncpa [#allocation4], 1
    %s1654 = scalar_lea.sflag [#allocation4], 1
    %1655 = vsyncpa %s1654, 1

</llo_original>
